<compile_context>
chip_gen: v5e
topology: v5e:2x2
jax: 0.10.0
libtpu: 0.0.40
codegen_flags: <defaults>
</compile_context>

<pallas_src>
import functools

import jax
import jax.numpy as jnp
from jax.experimental import pallas as pl
from jax.experimental.pallas import tpu as pltpu

EPS = 1e-5
N_LAYERS = 3          # PyTorch default
LANE = 128
SUBLANE = 16          # bf16 row-packing granule


def _round_up(x, m):
    return (x + m - 1) // m * m


def _vmem_budget_bytes():
    """Generation-aware scoped-VMEM cap (v5e/v6e: 128 MiB parts, v7x: 64 MiB)."""
    cap = 0
    try:
        cap = int(getattr(pltpu.get_tpu_info(), "vmem_capacity_bytes", 0))
    except Exception:
        cap = 0
    if cap <= 0:
        return 48 * 1024 * 1024            # unknown part: fit even v7x's 64 MiB
    if cap <= 64 * 1024 * 1024:            # v7x-class: leave compiler headroom
        return min(52 * 1024 * 1024, max(cap - 12 * 1024 * 1024, cap // 2))
    return min(100 * 1024 * 1024, int(cap * 0.8))   # v5e/v6e-class (128 MiB)


def _vmem_need_bytes(block_n, f_pad):
    """Rough per-call VMEM footprint, used to auto-shrink block_n."""
    return (2 * block_n * f_pad * 4      # streamed input tile (f32 worst case), 2 bufs
            + 2 * block_n * f_pad * 4    # streamed h/out tile (f32), 2 bufs
            + 2 * 2 * f_pad * f_pad      # resident bf16 weight (pipeline allocs 2 bufs)
            + 4 * 8 * f_pad * 4          # stats accumulator + scale/shift vectors
            + 4 * block_n * f_pad * 4)   # in-kernel f32 temporaries


def _linear_stats_kernel(*refs, apply_bn, block_n, n_true, needs_mask):
    """h = [BN+ReLU](a) @ W ; accumulate per-feature sum / sum-of-squares of h.

    refs = (a, [scale, shift,] w, h_out, stats_out).  stats_out is a
    VMEM-resident accumulator (constant out index map, "arbitrary" grid axis).
    """
    if apply_bn:
        a_ref, scale_ref, shift_ref, w_ref, h_ref, stats_ref = refs
    else:
        a_ref, w_ref, h_ref, stats_ref = refs

    i = pl.program_id(0)

    @pl.when(i == 0)
    def _():
        stats_ref[...] = jnp.zeros_like(stats_ref)

    if apply_bn:
        # Folded BatchNorm (scale/shift precomputed outside) + ReLU, all f32.
        a = jnp.maximum(a_ref[...] * scale_ref[...] + shift_ref[...], 0.0)
        if needs_mask:
            # Zero padded tail rows so they can't pollute this layer's stats
            # (the BN shift would otherwise make them nonzero).  Only emitted
            # when n % block_n != 0 (compile-time known).
            rows = i * block_n + jax.lax.broadcasted_iota(
                jnp.int32, (block_n, 1), 0)
            a = jnp.where(rows < n_true, a, 0.0)
        a = a.astype(w_ref.dtype)
    else:
        a = a_ref[...]          # first layer: x (padded rows already zero)

    h = jnp.dot(a, w_ref[...], preferred_element_type=jnp.float32)
    h_ref[...] = h
    # Padded rows of h are exactly zero -> plain column sums are correct.
    stats_ref[0:1, :] += jnp.sum(h, axis=0, keepdims=True)
    stats_ref[1:2, :] += jnp.sum(h * h, axis=0, keepdims=True)


def _final_layer_kernel(h_ref, scale_ref, shift_ref, w_ref, o_ref):
    """out = relu(h*scale + shift) @ W2 (no cross-tile dependency -> parallel)."""
    a = jnp.maximum(h_ref[...] * scale_ref[...] + shift_ref[...], 0.0)
    o_ref[...] = jnp.dot(a.astype(w_ref.dtype), w_ref[...],
                         preferred_element_type=jnp.float32).astype(o_ref.dtype)


def _linear_stats_call(a, scale, shift, w, *, apply_bn, block_n, n_tiles, f_pad,
                       n_true, needs_mask, vmem_limit):
    n_pad = n_tiles * block_n
    kernel = functools.partial(_linear_stats_kernel, apply_bn=apply_bn,
                               block_n=block_n, n_true=n_true,
                               needs_mask=needs_mask)
    tile_spec = pl.BlockSpec((block_n, f_pad), lambda i: (i, 0))
    vec_spec = pl.BlockSpec((1, f_pad), lambda i: (0, 0))        # resident
    w_spec = pl.BlockSpec((f_pad, f_pad), lambda i: (0, 0))      # resident
    in_specs = [tile_spec] + ([vec_spec, vec_spec] if apply_bn else []) + [w_spec]
    operands = [a] + ([scale, shift] if apply_bn else []) + [w]

    cost = pl.CostEstimate(
        flops=2 * n_pad * f_pad * f_pad,
        transcendentals=0,
        bytes_accessed=(a.size * a.dtype.itemsize + w.size * w.dtype.itemsize
                        + n_pad * f_pad * 4 + 8 * f_pad * 4),
    )
    h, stats = pl.pallas_call(
        kernel,
        out_shape=(jax.ShapeDtypeStruct((n_pad, f_pad), jnp.float32),
                   jax.ShapeDtypeStruct((8, f_pad), jnp.float32)),
        grid_spec=pltpu.PrefetchScalarGridSpec(
            num_scalar_prefetch=0,
            grid=(n_tiles,),
            in_specs=in_specs,
            out_specs=(pl.BlockSpec((block_n, f_pad), lambda i: (i, 0)),
                       pl.BlockSpec((8, f_pad), lambda i: (0, 0))),
        ),
        compiler_params=pltpu.CompilerParams(
            # Cross-tile statistics accumulation -> serial grid axis.
            dimension_semantics=("arbitrary",),
            vmem_limit_bytes=vmem_limit,
        ),
        cost_estimate=cost,
    )(*operands)
    return h, stats


def _final_layer_call(h, scale, shift, w, out_dtype, *, block_n, n_tiles, f_pad,
                      vmem_limit):
    n_pad = n_tiles * block_n
    out_bytes = jnp.dtype(out_dtype).itemsize
    cost = pl.CostEstimate(
        flops=2 * n_pad * f_pad * f_pad,
        transcendentals=0,
        bytes_accessed=(n_pad * f_pad * 4 + w.size * w.dtype.itemsize
                        + n_pad * f_pad * out_bytes),
    )
    return pl.pallas_call(
        _final_layer_kernel,
        out_shape=jax.ShapeDtypeStruct((n_pad, f_pad), out_dtype),
        grid_spec=pltpu.PrefetchScalarGridSpec(
            num_scalar_prefetch=0,
            grid=(n_tiles,),
            in_specs=[pl.BlockSpec((block_n, f_pad), lambda i: (i, 0)),
                      pl.BlockSpec((1, f_pad), lambda i: (0, 0)),
                      pl.BlockSpec((1, f_pad), lambda i: (0, 0)),
                      pl.BlockSpec((f_pad, f_pad), lambda i: (0, 0))],
            out_specs=pl.BlockSpec((block_n, f_pad), lambda i: (i, 0)),
        ),
        compiler_params=pltpu.CompilerParams(
            # Independent batch tiles: shard across v7x's two TensorCores.
            dimension_semantics=("parallel",),
            vmem_limit_bytes=vmem_limit,
        ),
        cost_estimate=cost,
    )(h, scale, shift, w)


@functools.partial(jax.jit, static_argnames=("block_n", "n_layers"))
def projector_forward(x, w1, w2, gamma, beta, *, block_n=1024,
                      n_layers=N_LAYERS):
    """Forward of `Projector`.  x: (N, F); w1/w2 in PyTorch (out, in) layout."""
    n, f_in = x.shape
    f_out = w1.shape[0]
    assert n_layers >= 2, "Projector kernel expects at least one BN block"
    assert w1.shape == (f_out, f_in) and w2.shape == (f_out, f_out)
    assert f_in == f_out, "shared Linear in Projector requires in == out"
    out_dtype = x.dtype
    cdt = jnp.bfloat16                  # MXU operand dtype (f32 accumulation)

    f_pad = _round_up(f_out, LANE)
    # Batch tile: multiple of 16 rows (bf16 sublane packing), as large as the
    # per-generation VMEM budget allows (per-grid-step overhead ~0.35us; big
    # tiles keep the MXU busy and amortize resident-weight pushes).
    bn_eff = _round_up(max(SUBLANE, min(block_n, _round_up(n, SUBLANE))), SUBLANE)
    budget = _vmem_budget_bytes()
    while bn_eff > SUBLANE and _vmem_need_bytes(bn_eff, f_pad) > budget:
        bn_eff = max(SUBLANE, _round_up(bn_eff // 2, SUBLANE))
    n_pad = _round_up(n, bn_eff)
    n_tiles = n_pad // bn_eff
    needs_mask = n_pad != n             # compile-time: do padded tail rows exist?
    vmem_limit = int(budget)

    # One-time pad + bf16 cast (+ weight transpose to (in, out)); cheap fused
    # XLA ops outside the kernels' hot loops.
    xp = jnp.pad(x.astype(cdt), ((0, n_pad - n), (0, f_pad - f_in)))
    w1p = jnp.pad(jnp.transpose(w1).astype(cdt),
                  ((0, f_pad - f_in), (0, f_pad - f_out)))
    w2p = jnp.pad(jnp.transpose(w2).astype(cdt),
                  ((0, f_pad - f_out), (0, f_pad - f_out)))
    # Padded features get gamma = beta = 0 so they stay exactly zero.
    gp = jnp.pad(gamma.astype(jnp.float32), (0, f_pad - f_out))
    bp = jnp.pad(beta.astype(jnp.float32), (0, f_pad - f_out))

    inv_n = 1.0 / float(n)
    h, scale, shift = xp, None, None
    # (n_layers - 1) shared [Linear(W1), BN, ReLU] blocks: each pass does ONE
    # matmul, carries the pre-activation h to the next pass (no recompute), and
    # accumulates that layer's whole-batch statistics.
    for layer in range(n_layers - 1):
        apply_bn = layer > 0
        h, stats = _linear_stats_call(
            h, scale, shift, w1p, apply_bn=apply_bn, block_n=bn_eff,
            n_tiles=n_tiles, f_pad=f_pad, n_true=n, needs_mask=needs_mask,
            vmem_limit=vmem_limit)
        # Fold BN into one per-feature scale/shift (tiny XLA ops, F elements).
        mean = stats[0] * inv_n
        var = jnp.maximum(stats[1] * inv_n - mean * mean, 0.0)  # single-pass var
        scale_v = jax.lax.rsqrt(var + EPS) * gp
        shift_v = bp - mean * scale_v
        scale = scale_v.reshape(1, f_pad)
        shift = shift_v.reshape(1, f_pad)

    # Final Linear(W2) with the last BN+ReLU fused as a prologue; parallel grid.
    out = _final_layer_call(h, scale, shift, w2p, out_dtype, block_n=bn_eff,
                            n_tiles=n_tiles, f_pad=f_pad, vmem_limit=vmem_limit)
    return out[:n, :f_out]


def projector_reference(x, w1, w2, gamma, beta, n_layers=N_LAYERS):
    """Pure-JAX f32 reference mirroring the PyTorch forward (training-mode BN)."""
    h = x.astype(jnp.float32)
    for _ in range(n_layers - 1):
        h = h @ w1.T.astype(jnp.float32)
        mean = jnp.mean(h, axis=0, keepdims=True)
        var = jnp.mean((h - mean) ** 2, axis=0, keepdims=True)
        h = (h - mean) / jnp.sqrt(var + EPS) * gamma + beta
        h = jnp.maximum(h, 0.0)
    return h @ w2.T.astype(jnp.float32)


def projector_reference_bf16(x, w1, w2, gamma, beta, n_layers=N_LAYERS):
    """Reference matching the kernel's precision (bf16 MXU operands, f32 stats)."""
    cdt = jnp.bfloat16
    n = x.shape[0]
    h = jnp.dot(x.astype(cdt), w1.astype(cdt).T,
                preferred_element_type=jnp.float32)
    for layer in range(n_layers - 1):
        mean = jnp.sum(h, axis=0) / n
        var = jnp.maximum(jnp.sum(h * h, axis=0) / n - mean * mean, 0.0)
        scale = jax.lax.rsqrt(var + EPS) * gamma
        shift = beta - mean * scale
        a = jnp.maximum(h * scale + shift, 0.0)
        w = w1 if layer < n_layers - 2 else w2
        h = jnp.dot(a.astype(cdt), w.astype(cdt).T,
                    preferred_element_type=jnp.float32)
    return h


if __name__ == "__main__":
    def _run_and_check(batch, features, block_n):
        key = jax.random.PRNGKey(0)
        kx, k1, k2, kg, kb = jax.random.split(key, 5)
        x = jax.random.normal(kx, (batch, features), dtype=jnp.float32)
        bound = 1.0 / (features ** 0.5)
        w1 = jax.random.uniform(k1, (features, features), jnp.float32,
                                -bound, bound)
        w2 = jax.random.uniform(k2, (features, features), jnp.float32,
                                -bound, bound)
        gamma = 1.0 + 0.1 * jax.random.normal(kg, (features,), jnp.float32)
        beta = 0.1 * jax.random.normal(kb, (features,), jnp.float32)

        out = jax.block_until_ready(
            projector_forward(x, w1, w2, gamma, beta, block_n=block_n))
        assert out.shape == (batch, features)
        assert jnp.allclose(out, projector_reference_bf16(x, w1, w2, gamma, beta),
                            atol=1e-2, rtol=1e-2), \
            f"mismatch vs precision-matched reference ({batch}x{features})"
        assert jnp.allclose(out, projector_reference(x, w1, w2, gamma, beta),
                            atol=1e-1, rtol=1e-1), \
            f"mismatch vs f32 reference ({batch}x{features})"

    # Awkward shapes: padded tail batch rows (50 -> 2 tiles of 32) and a
    # lane-padded feature dim (160 -> 256): exercises the row mask and the
    # multi-tile statistics accumulation.
    _run_and_check(batch=50, features=160, block_n=32)
    # Aligned shapes with a large single tile: exercises the mask-free path and
    # the default-style big batch tile.
    _run_and_check(batch=512, features=256, block_n=1024)
    print("KERNEL_OK")
</pallas_src>

<mosaic_0001>
module attributes {stable_mosaic.version = 11 : i64} {
  func.func @_linear_stats_kernel(%arg0: i32, %arg1: memref<32x256xbf16, #tpu.memory_space<vmem>>, %arg2: memref<256x256xbf16, #tpu.memory_space<vmem>>, %arg3: memref<32x256xf32, #tpu.memory_space<vmem>>, %arg4: memref<8x256xf32, #tpu.memory_space<vmem>>) attributes {dimension_semantics = [#tpu.dimension_semantics<arbitrary>], iteration_bounds = array<i64: 2>, scalar_prefetch = 0 : i64, scratch_operands = 0 : i64, tpu.core_type = #tpu.core_type<tc>, window_params = [{transform_indices = @transform_0, window_bounds = array<i64: 32, 256>}, {pipeline_mode = #tpu.pipeline_mode<synchronous>, transform_indices = @transform_1, window_bounds = array<i64: 256, 256>}, {transform_indices = @transform_2, window_bounds = array<i64: 32, 256>}, {pipeline_mode = #tpu.pipeline_mode<synchronous>, transform_indices = @transform_3, window_bounds = array<i64: 8, 256>}]} {
    %c0_i32 = arith.constant 0 : i32
    %0 = arith.cmpi eq, %arg0, %c0_i32 : i32
    %1 = arith.extui %0 : i1 to i32
    %c0_i32_0 = arith.constant 0 : i32
    %2 = arith.cmpi ne, %1, %c0_i32_0 : i32
    scf.if %2 {
      %cst_15 = arith.constant 0.000000e+00 : f32
      %18 = vector.broadcast %cst_15 : f32 to vector<8x256xf32>
      %c0_16 = arith.constant 0 : index
      %c0_17 = arith.constant 0 : index
      %19 = vector.load %arg4[%c0_16, %c0_17] : memref<8x256xf32, #tpu.memory_space<vmem>>, vector<8x256xf32>
      tpu.vector_store %arg4[%c0_16, %c0_17], %18 {strides = array<i32>} : memref<8x256xf32, #tpu.memory_space<vmem>>, vector<8x256xf32>,
    } else {
    }
    %c0 = arith.constant 0 : index
    %c0_1 = arith.constant 0 : index
    %3 = vector.load %arg1[%c0, %c0_1] : memref<32x256xbf16, #tpu.memory_space<vmem>>, vector<32x256xbf16>
    %c0_2 = arith.constant 0 : index
    %c0_3 = arith.constant 0 : index
    %4 = vector.load %arg2[%c0_2, %c0_3] : memref<256x256xbf16, #tpu.memory_space<vmem>>, vector<256x256xbf16>
    %cst = arith.constant dense<0.000000e+00> : vector<32x256xf32>
    %5 = tpu.matmul %3, %4, %cst {dimension_numbers = #tpu.dot_dimension_numbers<[1], [0], [0], [1], [0, 0, 1, 1], [], []>} : vector<32x256xbf16>, vector<256x256xbf16>, vector<32x256xf32> -> vector<32x256xf32>
    %c0_4 = arith.constant 0 : index
    %c0_5 = arith.constant 0 : index
    %6 = vector.load %arg3[%c0_4, %c0_5] : memref<32x256xf32, #tpu.memory_space<vmem>>, vector<32x256xf32>
    tpu.vector_store %arg3[%c0_4, %c0_5], %5 {strides = array<i32>} : memref<32x256xf32, #tpu.memory_space<vmem>>, vector<32x256xf32>,
    %c0_6 = arith.constant 0 : index
    %c0_7 = arith.constant 0 : index
    %7 = vector.load %arg4[%c0_6, %c0_7] : memref<8x256xf32, #tpu.memory_space<vmem>>, vector<1x256xf32>
    %cst_8 = arith.constant dense<0.000000e+00> : vector<256xf32>
    %8 = vector.multi_reduction <add>, %5, %cst_8 [0] : vector<32x256xf32> to vector<256xf32>
    %9 = vector.shape_cast %8 : vector<256xf32> to vector<1x256xf32>
    %10 = arith.addf %7, %9 : vector<1x256xf32>
    %c0_9 = arith.constant 0 : index
    %c0_10 = arith.constant 0 : index
    %11 = vector.load %arg4[%c0_9, %c0_10] : memref<8x256xf32, #tpu.memory_space<vmem>>, vector<1x256xf32>
    tpu.vector_store %arg4[%c0_9, %c0_10], %10 {strides = array<i32>} : memref<8x256xf32, #tpu.memory_space<vmem>>, vector<1x256xf32>,
    %c1 = arith.constant 1 : index
    %c0_11 = arith.constant 0 : index
    %12 = vector.load %arg4[%c1, %c0_11] : memref<8x256xf32, #tpu.memory_space<vmem>>, vector<1x256xf32>
    %13 = arith.mulf %5, %5 : vector<32x256xf32>
    %cst_12 = arith.constant dense<0.000000e+00> : vector<256xf32>
    %14 = vector.multi_reduction <add>, %13, %cst_12 [0] : vector<32x256xf32> to vector<256xf32>
    %15 = vector.shape_cast %14 : vector<256xf32> to vector<1x256xf32>
    %16 = arith.addf %12, %15 : vector<1x256xf32>
    %c1_13 = arith.constant 1 : index
    %c0_14 = arith.constant 0 : index
    %17 = vector.load %arg4[%c1_13, %c0_14] : memref<8x256xf32, #tpu.memory_space<vmem>>, vector<1x256xf32>
    tpu.vector_store %arg4[%c1_13, %c0_14], %16 {strides = array<i32>} : memref<8x256xf32, #tpu.memory_space<vmem>>, vector<1x256xf32>,
    return
  }
  func.func @transform_0(%arg0: i32) -> (i32, i32) {
    %c0_i32 = arith.constant 0 : i32
    %c0_i32_0 = arith.constant 0 : i32
    return %arg0, %c0_i32 : i32, i32
  }
  func.func @transform_1(%arg0: i32) -> (i32, i32) {
    %c0_i32 = arith.constant 0 : i32
    %c0_i32_0 = arith.constant 0 : i32
    %c0_i32_1 = arith.constant 0 : i32
    return %c0_i32, %c0_i32_0 : i32, i32
  }
  func.func @transform_2(%arg0: i32) -> (i32, i32) {
    %c0_i32 = arith.constant 0 : i32
    %c0_i32_0 = arith.constant 0 : i32
    return %arg0, %c0_i32 : i32, i32
  }
  func.func @transform_3(%arg0: i32) -> (i32, i32) {
    %c0_i32 = arith.constant 0 : i32
    %c0_i32_0 = arith.constant 0 : i32
    %c0_i32_1 = arith.constant 0 : i32
    return %c0_i32, %c0_i32_0 : i32, i32
  }
}

module attributes {stable_mosaic.version = 11 : i64} {
  func.func @_final_layer_kernel(%arg0: i32, %arg1: memref<32x256xf32, #tpu.memory_space<vmem>>, %arg2: memref<1x256xf32, #tpu.memory_space<vmem>>, %arg3: memref<1x256xf32, #tpu.memory_space<vmem>>, %arg4: memref<256x256xbf16, #tpu.memory_space<vmem>>, %arg5: memref<32x256xf32, #tpu.memory_space<vmem>>) attributes {dimension_semantics = [#tpu.dimension_semantics<parallel>], iteration_bounds = array<i64: 2>, scalar_prefetch = 0 : i64, scratch_operands = 0 : i64, tpu.core_type = #tpu.core_type<tc>, window_params = [{transform_indices = @transform_0, window_bounds = array<i64: 32, 256>}, {pipeline_mode = #tpu.pipeline_mode<synchronous>, transform_indices = @transform_1, window_bounds = array<i64: 1, 256>}, {pipeline_mode = #tpu.pipeline_mode<synchronous>, transform_indices = @transform_2, window_bounds = array<i64: 1, 256>}, {pipeline_mode = #tpu.pipeline_mode<synchronous>, transform_indices = @transform_3, window_bounds = array<i64: 256, 256>}, {transform_indices = @transform_4, window_bounds = array<i64: 32, 256>}]} {
    %c0 = arith.constant 0 : index
    %c0_0 = arith.constant 0 : index
    %0 = vector.load %arg1[%c0, %c0_0] : memref<32x256xf32, #tpu.memory_space<vmem>>, vector<32x256xf32>
    %c0_1 = arith.constant 0 : index
    %c0_2 = arith.constant 0 : index
    %1 = vector.load %arg2[%c0_1, %c0_2] : memref<1x256xf32, #tpu.memory_space<vmem>>, vector<1x256xf32>
    %2 = vector.broadcast %1 : vector<1x256xf32> to vector<32x256xf32>
    %3 = arith.mulf %0, %2 : vector<32x256xf32>
    %c0_3 = arith.constant 0 : index
    %c0_4 = arith.constant 0 : index
    %4 = vector.load %arg3[%c0_3, %c0_4] : memref<1x256xf32, #tpu.memory_space<vmem>>, vector<1x256xf32>
    %5 = vector.broadcast %4 : vector<1x256xf32> to vector<32x256xf32>
    %6 = arith.addf %3, %5 : vector<32x256xf32>
    %cst = arith.constant 0.000000e+00 : f32
    %7 = vector.broadcast %cst : f32 to vector<32x256xf32>
    %8 = arith.maximumf %6, %7 : vector<32x256xf32>
    %9 = arith.truncf %8 : vector<32x256xf32> to vector<32x256xbf16>
    %c0_5 = arith.constant 0 : index
    %c0_6 = arith.constant 0 : index
    %10 = vector.load %arg4[%c0_5, %c0_6] : memref<256x256xbf16, #tpu.memory_space<vmem>>, vector<256x256xbf16>
    %cst_7 = arith.constant dense<0.000000e+00> : vector<32x256xf32>
    %11 = tpu.matmul %9, %10, %cst_7 {dimension_numbers = #tpu.dot_dimension_numbers<[1], [0], [0], [1], [0, 0, 1, 1], [], []>} : vector<32x256xbf16>, vector<256x256xbf16>, vector<32x256xf32> -> vector<32x256xf32>
    %c0_8 = arith.constant 0 : index
    %c0_9 = arith.constant 0 : index
    %12 = vector.load %arg5[%c0_8, %c0_9] : memref<32x256xf32, #tpu.memory_space<vmem>>, vector<32x256xf32>
    tpu.vector_store %arg5[%c0_8, %c0_9], %11 {strides = array<i32>} : memref<32x256xf32, #tpu.memory_space<vmem>>, vector<32x256xf32>,
    return
  }
  func.func @transform_0(%arg0: i32) -> (i32, i32) {
    %c0_i32 = arith.constant 0 : i32
    %c0_i32_0 = arith.constant 0 : i32
    return %arg0, %c0_i32 : i32, i32
  }
  func.func @transform_1(%arg0: i32) -> (i32, i32) {
    %c0_i32 = arith.constant 0 : i32
    %c0_i32_0 = arith.constant 0 : i32
    %c0_i32_1 = arith.constant 0 : i32
    return %c0_i32, %c0_i32_0 : i32, i32
  }
  func.func @transform_2(%arg0: i32) -> (i32, i32) {
    %c0_i32 = arith.constant 0 : i32
    %c0_i32_0 = arith.constant 0 : i32
    %c0_i32_1 = arith.constant 0 : i32
    return %c0_i32, %c0_i32_0 : i32, i32
  }
  func.func @transform_3(%arg0: i32) -> (i32, i32) {
    %c0_i32 = arith.constant 0 : i32
    %c0_i32_0 = arith.constant 0 : i32
    %c0_i32_1 = arith.constant 0 : i32
    return %c0_i32, %c0_i32_0 : i32, i32
  }
  func.func @transform_4(%arg0: i32) -> (i32, i32) {
    %c0_i32 = arith.constant 0 : i32
    %c0_i32_0 = arith.constant 0 : i32
    return %arg0, %c0_i32 : i32, i32
  }
}

module attributes {stable_mosaic.version = 11 : i64} {
  func.func @_linear_stats_kernel(%arg0: i32, %arg1: memref<32x256xf32, #tpu.memory_space<vmem>>, %arg2: memref<1x256xf32, #tpu.memory_space<vmem>>, %arg3: memref<1x256xf32, #tpu.memory_space<vmem>>, %arg4: memref<256x256xbf16, #tpu.memory_space<vmem>>, %arg5: memref<32x256xf32, #tpu.memory_space<vmem>>, %arg6: memref<8x256xf32, #tpu.memory_space<vmem>>) attributes {dimension_semantics = [#tpu.dimension_semantics<arbitrary>], iteration_bounds = array<i64: 2>, scalar_prefetch = 0 : i64, scratch_operands = 0 : i64, tpu.core_type = #tpu.core_type<tc>, window_params = [{transform_indices = @transform_0, window_bounds = array<i64: 32, 256>}, {pipeline_mode = #tpu.pipeline_mode<synchronous>, transform_indices = @transform_1, window_bounds = array<i64: 1, 256>}, {pipeline_mode = #tpu.pipeline_mode<synchronous>, transform_indices = @transform_2, window_bounds = array<i64: 1, 256>}, {pipeline_mode = #tpu.pipeline_mode<synchronous>, transform_indices = @transform_3, window_bounds = array<i64: 256, 256>}, {transform_indices = @transform_4, window_bounds = array<i64: 32, 256>}, {pipeline_mode = #tpu.pipeline_mode<synchronous>, transform_indices = @transform_5, window_bounds = array<i64: 8, 256>}]} {
    %c0_i32 = arith.constant 0 : i32
    %0 = arith.cmpi eq, %arg0, %c0_i32 : i32
    %1 = arith.extui %0 : i1 to i32
    %c0_i32_0 = arith.constant 0 : i32
    %2 = arith.cmpi ne, %1, %c0_i32_0 : i32
    scf.if %2 {
      %cst_21 = arith.constant 0.000000e+00 : f32
      %37 = vector.broadcast %cst_21 : f32 to vector<8x256xf32>
      %c0_22 = arith.constant 0 : index
      %c0_23 = arith.constant 0 : index
      %38 = vector.load %arg6[%c0_22, %c0_23] : memref<8x256xf32, #tpu.memory_space<vmem>>, vector<8x256xf32>
      tpu.vector_store %arg6[%c0_22, %c0_23], %37 {strides = array<i32>} : memref<8x256xf32, #tpu.memory_space<vmem>>, vector<8x256xf32>,
    } else {
    }
    %c0 = arith.constant 0 : index
    %c0_1 = arith.constant 0 : index
    %3 = vector.load %arg1[%c0, %c0_1] : memref<32x256xf32, #tpu.memory_space<vmem>>, vector<32x256xf32>
    %c0_2 = arith.constant 0 : index
    %c0_3 = arith.constant 0 : index
    %4 = vector.load %arg2[%c0_2, %c0_3] : memref<1x256xf32, #tpu.memory_space<vmem>>, vector<1x256xf32>
    %5 = vector.broadcast %4 : vector<1x256xf32> to vector<32x256xf32>
    %6 = arith.mulf %3, %5 : vector<32x256xf32>
    %c0_4 = arith.constant 0 : index
    %c0_5 = arith.constant 0 : index
    %7 = vector.load %arg3[%c0_4, %c0_5] : memref<1x256xf32, #tpu.memory_space<vmem>>, vector<1x256xf32>
    %8 = vector.broadcast %7 : vector<1x256xf32> to vector<32x256xf32>
    %9 = arith.addf %6, %8 : vector<32x256xf32>
    %cst = arith.constant 0.000000e+00 : f32
    %10 = vector.broadcast %cst : f32 to vector<32x256xf32>
    %11 = arith.maximumf %9, %10 : vector<32x256xf32>
    %c32_i32 = arith.constant 32 : i32
    %12 = arith.muli %arg0, %c32_i32 : i32
    %13 = tpu.iota {dimensions = array<i32: 0>} : vector<32x1xi32>
    %14 = vector.broadcast %12 : i32 to vector<32x1xi32>
    %15 = arith.addi %14, %13 : vector<32x1xi32>
    %c50_i32 = arith.constant 50 : i32
    %16 = vector.broadcast %c50_i32 : i32 to vector<32x1xi32>
    %17 = arith.cmpi slt, %15, %16 : vector<32x1xi32>
    %cst_6 = arith.constant 0.000000e+00 : f32
    %18 = vector.shape_cast %17 : vector<32x1xi1> to vector<32x1xi1>
    %19 = vector.broadcast %18 : vector<32x1xi1> to vector<32x256xi1>
    %20 = vector.broadcast %cst_6 : f32 to vector<32x256xf32>
    %21 = arith.select %19, %11, %20 : vector<32x256xi1>, vector<32x256xf32>
    %22 = arith.truncf %21 : vector<32x256xf32> to vector<32x256xbf16>
    %c0_7 = arith.constant 0 : index
    %c0_8 = arith.constant 0 : index
    %23 = vector.load %arg4[%c0_7, %c0_8] : memref<256x256xbf16, #tpu.memory_space<vmem>>, vector<256x256xbf16>
    %cst_9 = arith.constant dense<0.000000e+00> : vector<32x256xf32>
    %24 = tpu.matmul %22, %23, %cst_9 {dimension_numbers = #tpu.dot_dimension_numbers<[1], [0], [0], [1], [0, 0, 1, 1], [], []>} : vector<32x256xbf16>, vector<256x256xbf16>, vector<32x256xf32> -> vector<32x256xf32>
    %c0_10 = arith.constant 0 : index
    %c0_11 = arith.constant 0 : index
    %25 = vector.load %arg5[%c0_10, %c0_11] : memref<32x256xf32, #tpu.memory_space<vmem>>, vector<32x256xf32>
    tpu.vector_store %arg5[%c0_10, %c0_11], %24 {strides = array<i32>} : memref<32x256xf32, #tpu.memory_space<vmem>>, vector<32x256xf32>,
    %c0_12 = arith.constant 0 : index
    %c0_13 = arith.constant 0 : index
    %26 = vector.load %arg6[%c0_12, %c0_13] : memref<8x256xf32, #tpu.memory_space<vmem>>, vector<1x256xf32>
    %cst_14 = arith.constant dense<0.000000e+00> : vector<256xf32>
    %27 = vector.multi_reduction <add>, %24, %cst_14 [0] : vector<32x256xf32> to vector<256xf32>
    %28 = vector.shape_cast %27 : vector<256xf32> to vector<1x256xf32>
    %29 = arith.addf %26, %28 : vector<1x256xf32>
    %c0_15 = arith.constant 0 : index
    %c0_16 = arith.constant 0 : index
    %30 = vector.load %arg6[%c0_15, %c0_16] : memref<8x256xf32, #tpu.memory_space<vmem>>, vector<1x256xf32>
    tpu.vector_store %arg6[%c0_15, %c0_16], %29 {strides = array<i32>} : memref<8x256xf32, #tpu.memory_space<vmem>>, vector<1x256xf32>,
    %c1 = arith.constant 1 : index
    %c0_17 = arith.constant 0 : index
    %31 = vector.load %arg6[%c1, %c0_17] : memref<8x256xf32, #tpu.memory_space<vmem>>, vector<1x256xf32>
    %32 = arith.mulf %24, %24 : vector<32x256xf32>
    %cst_18 = arith.constant dense<0.000000e+00> : vector<256xf32>
    %33 = vector.multi_reduction <add>, %32, %cst_18 [0] : vector<32x256xf32> to vector<256xf32>
    %34 = vector.shape_cast %33 : vector<256xf32> to vector<1x256xf32>
    %35 = arith.addf %31, %34 : vector<1x256xf32>
    %c1_19 = arith.constant 1 : index
    %c0_20 = arith.constant 0 : index
    %36 = vector.load %arg6[%c1_19, %c0_20] : memref<8x256xf32, #tpu.memory_space<vmem>>, vector<1x256xf32>
    tpu.vector_store %arg6[%c1_19, %c0_20], %35 {strides = array<i32>} : memref<8x256xf32, #tpu.memory_space<vmem>>, vector<1x256xf32>,
    return
  }
  func.func @transform_0(%arg0: i32) -> (i32, i32) {
    %c0_i32 = arith.constant 0 : i32
    %c0_i32_0 = arith.constant 0 : i32
    return %arg0, %c0_i32 : i32, i32
  }
  func.func @transform_1(%arg0: i32) -> (i32, i32) {
    %c0_i32 = arith.constant 0 : i32
    %c0_i32_0 = arith.constant 0 : i32
    %c0_i32_1 = arith.constant 0 : i32
    return %c0_i32, %c0_i32_0 : i32, i32
  }
  func.func @transform_2(%arg0: i32) -> (i32, i32) {
    %c0_i32 = arith.constant 0 : i32
    %c0_i32_0 = arith.constant 0 : i32
    %c0_i32_1 = arith.constant 0 : i32
    return %c0_i32, %c0_i32_0 : i32, i32
  }
  func.func @transform_3(%arg0: i32) -> (i32, i32) {
    %c0_i32 = arith.constant 0 : i32
    %c0_i32_0 = arith.constant 0 : i32
    %c0_i32_1 = arith.constant 0 : i32
    return %c0_i32, %c0_i32_0 : i32, i32
  }
  func.func @transform_4(%arg0: i32) -> (i32, i32) {
    %c0_i32 = arith.constant 0 : i32
    %c0_i32_0 = arith.constant 0 : i32
    return %arg0, %c0_i32 : i32, i32
  }
  func.func @transform_5(%arg0: i32) -> (i32, i32) {
    %c0_i32 = arith.constant 0 : i32
    %c0_i32_0 = arith.constant 0 : i32
    %c0_i32_1 = arith.constant 0 : i32
    return %c0_i32, %c0_i32_0 : i32, i32
  }
}

</mosaic_0001>

<llo_original>
// kernel: projector_forward.5
$region0: #{projector_forward.5}
  #allocation0 [shape = 'u32[]', space=smem, size = 0x4, offset = 0x4, fixed_abs, tag = 'smem constant byte address 0x4 - core index']
  #allocation1 [shape = 'u32[72,128]{1,0:T(1,128)}', space=vmem, size = 0x9000, scoped, tag = 'internal scratch']
  %s0 = inlined_call_operand.vmem [shape: f32[64,256], index: 0, kind: input, shape index: {}]
  %s1 = inlined_call_operand.vmem [shape: f32[1,256], index: 1, kind: input, shape index: {}]
  %s2 = inlined_call_operand.vmem [shape: f32[1,256], index: 2, kind: input, shape index: {}]
  %s3 = inlined_call_operand.vmem [shape: bf16[256,256], index: 3, kind: input, shape index: {}]
  %s4 = inlined_call_operand.vmem [shape: f32[64,256], index: 4, kind: output, shape index: {}]
  %s5 = sld [smem:[#allocation0]]
  $region49: #{projector_forward.5} parent=0
    _
  %s7 = ssub.s32 1, %s5
  %s8 = scalar_select 0, %s7, %s5
  loop: start=0, step=1, limit=4
  $region2: #{projector_forward.5} parent=0 // loop_pre_header
    _
  $region3: #{projector_forward.5} parent=0 // loop_header
    %s10 = sphi 0, %s14
    %p11 = scmp.ge.s32.totalorder %s10, 4
    %s20 = sphi 0, %s22
    %s23 = sphi 0, %s20
    %s24 = sphi 0, %s23
    %s40 = sphi 0, %s24
    %s44 = sphi 0, %s44
    %s46 = sphi 0, %s44
    %s47 = sphi 0, %s46
    %s61 = sphi 0, %s47
    %s65 = sphi 0, %s65
    %s67 = sphi 0, %s65
    %s68 = sphi 0, %s67
    %s82 = sphi 0, %s68
    %s86 = sphi 0, %s86
    %s88 = sphi 0, %s86
    %s89 = sphi 0, %s88
    %s103 = sphi 0, %s89
    %s109 = sphi 0, %s111
    %s112 = sphi 0, %s109
    %s113 = sphi 0, %s112
    %s129 = sphi 0, %s113
  $region4: #{projector_forward.5} parent=0 // loop_header_branch
    %13 = sbr.rel (%p11) target = $region8
  $region5: #{projector_forward.5} parent=0 // loop_body
    %s15 = ssub.s32 %s10, 1
    %s16 = ssub.s32 %s10, 2
    %s17 = sadd.s32 %s10, 1
    %s18 = ssub.s32 %s10, %s17
    %p19 = scmp.eq.s32.totalorder %s18, 0
    %s21 = sadd.s32 %s20, 1
    %s22 = scalar_select %p19, %s20, %s21
    %p25 = pneg %p19
    %p26 = scmp.eq.s32.totalorder %s10, 1
    %p27 = por %p25, %p26
    %p28 = scmp.ne.s32.totalorder %s20, %s23
    %p29 = scmp.eq.s32.totalorder %s10, 0
    %p30 = por %p28, %p29
    %p31 = scmp.ne.s32.totalorder %s20, %s23
    %p32 = scmp.eq.s32.totalorder %s15, 1
    %p33 = por %p31, %p32
    %p34 = scmp.ne.s32.totalorder %s23, %s24
    %p35 = scmp.eq.s32.totalorder %s15, 0
    %p36 = por %p34, %p35
    %p37 = scmp.ne.s32.totalorder %s23, %s24
    %p38 = scmp.eq.s32.totalorder %s16, 1
    %p39 = por %p37, %p38
    %p41 = scmp.ne.s32.totalorder %s24, %s40
    %p42 = scmp.eq.s32.totalorder %s16, 0
    %p43 = por %p41, %p42
    %s45 = sadd.s32 %s44, 1
    %p48 = scmp.eq.s32.totalorder %s10, 1
    %p49 = scmp.ne.s32.totalorder %s44, %s46
    %p50 = scmp.eq.s32.totalorder %s10, 0
    %p51 = por %p49, %p50
    %p52 = scmp.ne.s32.totalorder %s44, %s46
    %p53 = scmp.eq.s32.totalorder %s15, 1
    %p54 = por %p52, %p53
    %p55 = scmp.ne.s32.totalorder %s46, %s47
    %p56 = scmp.eq.s32.totalorder %s15, 0
    %p57 = por %p55, %p56
    %p58 = scmp.ne.s32.totalorder %s46, %s47
    %p59 = scmp.eq.s32.totalorder %s16, 1
    %p60 = por %p58, %p59
    %p62 = scmp.ne.s32.totalorder %s47, %s61
    %p63 = scmp.eq.s32.totalorder %s16, 0
    %p64 = por %p62, %p63
    %s66 = sadd.s32 %s65, 1
    %p69 = scmp.eq.s32.totalorder %s10, 1
    %p70 = scmp.ne.s32.totalorder %s65, %s67
    %p71 = scmp.eq.s32.totalorder %s10, 0
    %p72 = por %p70, %p71
    %p73 = scmp.ne.s32.totalorder %s65, %s67
    %p74 = scmp.eq.s32.totalorder %s15, 1
    %p75 = por %p73, %p74
    %p76 = scmp.ne.s32.totalorder %s67, %s68
    %p77 = scmp.eq.s32.totalorder %s15, 0
    %p78 = por %p76, %p77
    %p79 = scmp.ne.s32.totalorder %s67, %s68
    %p80 = scmp.eq.s32.totalorder %s16, 1
    %p81 = por %p79, %p80
    %p83 = scmp.ne.s32.totalorder %s68, %s82
    %p84 = scmp.eq.s32.totalorder %s16, 0
    %p85 = por %p83, %p84
    %s87 = sadd.s32 %s86, 1
    %p90 = scmp.eq.s32.totalorder %s10, 1
    %p91 = scmp.ne.s32.totalorder %s86, %s88
    %p92 = scmp.eq.s32.totalorder %s10, 0
    %p93 = por %p91, %p92
    %p94 = scmp.ne.s32.totalorder %s86, %s88
    %p95 = scmp.eq.s32.totalorder %s15, 1
    %p96 = por %p94, %p95
    %p97 = scmp.ne.s32.totalorder %s88, %s89
    %p98 = scmp.eq.s32.totalorder %s15, 0
    %p99 = por %p97, %p98
    %p100 = scmp.ne.s32.totalorder %s88, %s89
    %p101 = scmp.eq.s32.totalorder %s16, 1
    %p102 = por %p100, %p101
    %p104 = scmp.ne.s32.totalorder %s89, %s103
    %p105 = scmp.eq.s32.totalorder %s16, 0
    %p106 = por %p104, %p105
    %s107 = ssub.s32 %s10, %s17
    %p108 = scmp.eq.s32.totalorder %s107, 0
    %s110 = sadd.s32 %s109, 1
    %s111 = scalar_select %p108, %s109, %s110
    %p114 = pneg %p108
    %p115 = scmp.eq.s32.totalorder %s10, 1
    %p116 = por %p114, %p115
    %p117 = scmp.ne.s32.totalorder %s109, %s112
    %p118 = scmp.eq.s32.totalorder %s10, 0
    %p119 = por %p117, %p118
    %p120 = scmp.ne.s32.totalorder %s109, %s112
    %p121 = scmp.eq.s32.totalorder %s15, 1
    %p122 = por %p120, %p121
    %p123 = scmp.ne.s32.totalorder %s112, %s113
    %p124 = scmp.eq.s32.totalorder %s15, 0
    %p125 = por %p123, %p124
    %p126 = scmp.ne.s32.totalorder %s112, %s113
    %p127 = scmp.eq.s32.totalorder %s16, 1
    %p128 = por %p126, %p127
    %p130 = scmp.ne.s32.totalorder %s113, %s129
    %p131 = scmp.eq.s32.totalorder %s16, 0
    %p132 = por %p130, %p131
    %p133 = scmp.le.s32.totalorder 1, %s10
    %p134 = scmp.lt.s32.totalorder %s10, 3
    %p135 = pnand %p133, %p134
    %p136 = pneg %p135
    // Predicated region
    $region9: #{projector_forward.5} parent=5 // pred_check
      _
    $region10: #{projector_forward.5} parent=5 // pred_check_branch
      %138 = sbr.rel (%p135) target = $region12
    $region11: #{projector_forward.5} parent=5 // pred_region
      %s139 = ssub.s32 %s10, 1
      // Predicated region
      $region13: #{projector_forward.5} parent=11 // pred_check
        %p140 = pneg %p57
      $region14: #{projector_forward.5} parent=11 // pred_check_branch
        %142 = sbr.rel (%p140) target = $region16
      $region15: #{projector_forward.5} parent=11 // pred_region
        _
      $region16: #{projector_forward.5} parent=11 // pred_fallthru
        _
      // Predicated region
      $region17: #{projector_forward.5} parent=11 // pred_check
        %p143 = pneg %p78
      $region18: #{projector_forward.5} parent=11 // pred_check_branch
        %145 = sbr.rel (%p143) target = $region20
      $region19: #{projector_forward.5} parent=11 // pred_region
        _
      $region20: #{projector_forward.5} parent=11 // pred_fallthru
        _
      // Predicated region
      $region21: #{projector_forward.5} parent=11 // pred_check
        %p146 = pneg %p99
      $region22: #{projector_forward.5} parent=11 // pred_check_branch
        %148 = sbr.rel (%p146) target = $region24
      $region23: #{projector_forward.5} parent=11 // pred_region
        _
      $region24: #{projector_forward.5} parent=11 // pred_fallthru
        _
    $region12: #{projector_forward.5} parent=5 // pred_fallthru
      _
    %p149 = scmp.lt.s32.totalorder %s10, 2
    // Predicated region
    $region25: #{projector_forward.5} parent=5 // pred_check
      %p150 = pneg %p149
    $region26: #{projector_forward.5} parent=5 // pred_check_branch
      %152 = sbr.rel (%p150) target = $region28
    $region27: #{projector_forward.5} parent=5 // pred_region
      // Predicated region
      $region29: #{projector_forward.5} parent=27 // pred_check
        %p153 = pneg %p30
      $region30: #{projector_forward.5} parent=27 // pred_check_branch
        %155 = sbr.rel (%p153) target = $region32
      $region31: #{projector_forward.5} parent=27 // pred_region
        %s156 = smul.u32 4, %s10
        %p157 = scmp.lt.s32.totalorder %s156, 7
        %s158 = scalar_select %p157, %s156, 7
        %s159 = smul.addr %s158, 2
        %s160 = smul.addr %s159, 8
        %s161 = scalar_lea.vmem %s0, %s160
        %s162 = smul.u32 4, %s10
      $region32: #{projector_forward.5} parent=27 // pred_fallthru
        _
    $region28: #{projector_forward.5} parent=5 // pred_fallthru
      _
    %p163 = scmp.le.s32.totalorder 1, %s10
    %p164 = scmp.lt.s32.totalorder %s10, 3
    %p165 = pnand %p163, %p164
    %p166 = pneg %p165
    // Predicated region
    $region33: #{projector_forward.5} parent=5 // pred_check
      _
    $region34: #{projector_forward.5} parent=5 // pred_check_branch
      %168 = sbr.rel (%p165) target = $region36
    $region35: #{projector_forward.5} parent=5 // pred_region
      %s169 = ssub.s32 %s10, 1
      %s170 = smul.u32 4, %s15
      %p171 = scmp.lt.s32.totalorder %s170, 7
      %s172 = scalar_select %p171, %s170, 7
      %s173 = smul.addr %s172, 2
      %s174 = smul.addr %s173, 8
      %s175 = scalar_lea.vmem %s0, %s174
      %p176 = pneg %p36
      %p177 = pneg %p33
      %p178 = pneg %p57
      %p179 = pneg %p54
      %p180 = pneg %p78
      %p181 = pneg %p75
      %p182 = pneg %p99
      %p183 = pneg %p96
      %p184 = pneg %p125
      %p185 = pneg %p122
      %s186 = smul.u32 4, %s15
      %p187 = scmp.lt.s32.totalorder %s186, 7
      %s188 = scalar_select %p187, %s186, 7
      %s189 = smul.addr %s188, 2
      %s190 = smul.addr %s189, 8
      %s191 = scalar_lea.vmem %s4, %s190
      %s192 = smul.u32 4, %s15
      %p193 = scmp.lt.s32.totalorder %s192, 7
      %s194 = scalar_select %p193, %s192, 7
      %s195 = smul.addr %s194, 2
      %s196 = smul.addr %s195, 8
      %s197 = scalar_lea.vmem %s0, %s196
      %s198 = smul.u32 4, %s15
      %s199 = smul.u32 4, %s15
      %p200 = scmp.lt.s32.totalorder %s199, 7
      %s201 = scalar_select %p200, %s199, 7
      %s202 = smul.addr %s201, 2
      %s203 = smul.addr %s202, 8
      %s204 = scalar_lea.vmem %s4, %s203
      %s205 = smul.u32 4, %s15
      %v206 = vld [vmem:[%s197] sm:$0xff]
      %v207 = vld [vmem:[%s197 + $0x8] sm:$0xff]
      %v208 = vld [vmem:[%s197 + $0x10] sm:$0xff]
      %v209 = vld [vmem:[%s197 + $0x18] sm:$0xff]
      %v210 = vld [vmem:[%s197 + $0x20] sm:$0xff]
      %v211 = vld [vmem:[%s197 + $0x28] sm:$0xff]
      %v212 = vld [vmem:[%s197 + $0x30] sm:$0xff]
      %v213 = vld [vmem:[%s197 + $0x38] sm:$0xff]
      %v214 = vld [vmem:[%s1] sm:$0x3]
      %v216 = vperm.slane %v214, 0
      %v217 = vperm.slane %v214, 1
      %v220 = vmul.f32 %v206, %v216
      %v221 = vmul.f32 %v207, %v217
      %v222 = vmul.f32 %v208, %v216
      %v223 = vmul.f32 %v209, %v217
      %v224 = vmul.f32 %v210, %v216
      %v225 = vmul.f32 %v211, %v217
      %v226 = vmul.f32 %v212, %v216
      %v227 = vmul.f32 %v213, %v217
      %v228 = vld [vmem:[%s2] sm:$0x3]
      %v230 = vperm.slane %v228, 0
      %v231 = vperm.slane %v228, 1
      %v234 = vadd.f32 %v220, %v230
      %v235 = vadd.f32 %v221, %v231
      %v236 = vadd.f32 %v222, %v230
      %v237 = vadd.f32 %v223, %v231
      %v238 = vadd.f32 %v224, %v230
      %v239 = vadd.f32 %v225, %v231
      %v240 = vadd.f32 %v226, %v230
      %v241 = vadd.f32 %v227, %v231
      %v242 = vmax.f32 %v234, 0.0
      %v243 = vmax.f32 %v235, 0.0
      %v244 = vmax.f32 %v236, 0.0
      %v245 = vmax.f32 %v237, 0.0
      %v246 = vmax.f32 %v238, 0.0
      %v247 = vmax.f32 %v239, 0.0
      %v248 = vmax.f32 %v240, 0.0
      %v249 = vmax.f32 %v241, 0.0
      %v250 = vpack.c.bf16 %v244, %v242
      %v251 = vpack.c.bf16 %v245, %v243
      %v252 = vpack.c.bf16 %v248, %v246
      %v253 = vpack.c.bf16 %v249, %v247
      %v254 = vld [vmem:[%s3] sm:$0xff]
      %v255 = vld [vmem:[%s3 + $0x8] sm:$0xff]
      %v256 = vld [vmem:[%s3 + $0x10] sm:$0xff]
      %v257 = vld [vmem:[%s3 + $0x18] sm:$0xff]
      %v258 = vld [vmem:[%s3 + $0x20] sm:$0xff]
      %v259 = vld [vmem:[%s3 + $0x28] sm:$0xff]
      %v260 = vld [vmem:[%s3 + $0x30] sm:$0xff]
      %v261 = vld [vmem:[%s3 + $0x38] sm:$0xff]
      %v262 = vld [vmem:[%s3 + $0x40] sm:$0xff]
      %v263 = vld [vmem:[%s3 + $0x48] sm:$0xff]
      %v264 = vld [vmem:[%s3 + $0x50] sm:$0xff]
      %v265 = vld [vmem:[%s3 + $0x58] sm:$0xff]
      %v266 = vld [vmem:[%s3 + $0x60] sm:$0xff]
      %v267 = vld [vmem:[%s3 + $0x68] sm:$0xff]
      %v268 = vld [vmem:[%s3 + $0x70] sm:$0xff]
      %v269 = vld [vmem:[%s3 + $0x78] sm:$0xff]
      %v270 = vld [vmem:[%s3 + $0x80] sm:$0xff]
      %v271 = vld [vmem:[%s3 + $0x88] sm:$0xff]
      %v272 = vld [vmem:[%s3 + $0x90] sm:$0xff]
      %v273 = vld [vmem:[%s3 + $0x98] sm:$0xff]
      %v274 = vld [vmem:[%s3 + $0xa0] sm:$0xff]
      %v275 = vld [vmem:[%s3 + $0xa8] sm:$0xff]
      %v276 = vld [vmem:[%s3 + $0xb0] sm:$0xff]
      %v277 = vld [vmem:[%s3 + $0xb8] sm:$0xff]
      %v278 = vld [vmem:[%s3 + $0xc0] sm:$0xff]
      %v279 = vld [vmem:[%s3 + $0xc8] sm:$0xff]
      %v280 = vld [vmem:[%s3 + $0xd0] sm:$0xff]
      %v281 = vld [vmem:[%s3 + $0xd8] sm:$0xff]
      %v282 = vld [vmem:[%s3 + $0xe0] sm:$0xff]
      %v283 = vld [vmem:[%s3 + $0xe8] sm:$0xff]
      %v284 = vld [vmem:[%s3 + $0xf0] sm:$0xff]
      %v285 = vld [vmem:[%s3 + $0xf8] sm:$0xff]
      %v318 = vunpack.c.l.b16 %v254
      %v319 = vunpack.c.h.b16 %v254
      %v320 = vunpack.c.l.b16 %v255
      %v321 = vunpack.c.h.b16 %v255
      %v322 = vunpack.c.l.b16 %v256
      %v323 = vunpack.c.h.b16 %v256
      %v324 = vunpack.c.l.b16 %v257
      %v325 = vunpack.c.h.b16 %v257
      %v326 = vunpack.c.l.b16 %v258
      %v327 = vunpack.c.h.b16 %v258
      %v328 = vunpack.c.l.b16 %v259
      %v329 = vunpack.c.h.b16 %v259
      %v330 = vunpack.c.l.b16 %v260
      %v331 = vunpack.c.h.b16 %v260
      %v332 = vunpack.c.l.b16 %v261
      %v333 = vunpack.c.h.b16 %v261
      %v334 = vunpack.c.l.b16 %v262
      %v335 = vunpack.c.h.b16 %v262
      %v336 = vunpack.c.l.b16 %v263
      %v337 = vunpack.c.h.b16 %v263
      %v338 = vunpack.c.l.b16 %v264
      %v339 = vunpack.c.h.b16 %v264
      %v340 = vunpack.c.l.b16 %v265
      %v341 = vunpack.c.h.b16 %v265
      %v342 = vunpack.c.l.b16 %v266
      %v343 = vunpack.c.h.b16 %v266
      %v344 = vunpack.c.l.b16 %v267
      %v345 = vunpack.c.h.b16 %v267
      %v346 = vunpack.c.l.b16 %v268
      %v347 = vunpack.c.h.b16 %v268
      %v348 = vunpack.c.l.b16 %v269
      %v349 = vunpack.c.h.b16 %v269
      %v350 = vunpack.c.l.b16 %v270
      %v351 = vunpack.c.h.b16 %v270
      %v352 = vunpack.c.l.b16 %v271
      %v353 = vunpack.c.h.b16 %v271
      %v354 = vunpack.c.l.b16 %v272
      %v355 = vunpack.c.h.b16 %v272
      %v356 = vunpack.c.l.b16 %v273
      %v357 = vunpack.c.h.b16 %v273
      %v358 = vunpack.c.l.b16 %v274
      %v359 = vunpack.c.h.b16 %v274
      %v360 = vunpack.c.l.b16 %v275
      %v361 = vunpack.c.h.b16 %v275
      %v362 = vunpack.c.l.b16 %v276
      %v363 = vunpack.c.h.b16 %v276
      %v364 = vunpack.c.l.b16 %v277
      %v365 = vunpack.c.h.b16 %v277
      %v366 = vunpack.c.l.b16 %v278
      %v367 = vunpack.c.h.b16 %v278
      %v368 = vunpack.c.l.b16 %v279
      %v369 = vunpack.c.h.b16 %v279
      %v370 = vunpack.c.l.b16 %v280
      %v371 = vunpack.c.h.b16 %v280
      %v372 = vunpack.c.l.b16 %v281
      %v373 = vunpack.c.h.b16 %v281
      %v374 = vunpack.c.l.b16 %v282
      %v375 = vunpack.c.h.b16 %v282
      %v376 = vunpack.c.l.b16 %v283
      %v377 = vunpack.c.h.b16 %v283
      %v378 = vunpack.c.l.b16 %v284
      %v379 = vunpack.c.h.b16 %v284
      %v380 = vunpack.c.l.b16 %v285
      %v381 = vunpack.c.h.b16 %v285
      %v382 = vpack.c.b16 %v320, %v318
      %v383 = vpack.c.b16 %v321, %v319
      %v384 = vpack.c.b16 %v324, %v322
      %v385 = vpack.c.b16 %v325, %v323
      %v386 = vpack.c.b16 %v328, %v326
      %v387 = vpack.c.b16 %v329, %v327
      %v388 = vpack.c.b16 %v332, %v330
      %v389 = vpack.c.b16 %v333, %v331
      %v390 = vpack.c.b16 %v336, %v334
      %v391 = vpack.c.b16 %v337, %v335
      %v392 = vpack.c.b16 %v340, %v338
      %v393 = vpack.c.b16 %v341, %v339
      %v394 = vpack.c.b16 %v344, %v342
      %v395 = vpack.c.b16 %v345, %v343
      %v396 = vpack.c.b16 %v348, %v346
      %v397 = vpack.c.b16 %v349, %v347
      %v398 = vpack.c.b16 %v352, %v350
      %v399 = vpack.c.b16 %v353, %v351
      %v400 = vpack.c.b16 %v356, %v354
      %v401 = vpack.c.b16 %v357, %v355
      %v402 = vpack.c.b16 %v360, %v358
      %v403 = vpack.c.b16 %v361, %v359
      %v404 = vpack.c.b16 %v364, %v362
      %v405 = vpack.c.b16 %v365, %v363
      %v406 = vpack.c.b16 %v368, %v366
      %v407 = vpack.c.b16 %v369, %v367
      %v408 = vpack.c.b16 %v372, %v370
      %v409 = vpack.c.b16 %v373, %v371
      %v410 = vpack.c.b16 %v376, %v374
      %v411 = vpack.c.b16 %v377, %v375
      %v412 = vpack.c.b16 %v380, %v378
      %v413 = vpack.c.b16 %v381, %v379
      %446 = vmatpush.bf16.msra.mxu0 %v396
      %447 = vmatpush.bf16.msra.mxu0 %v394
      %448 = vmatpush.bf16.msra.mxu0 %v392
      %449 = vmatpush.bf16.msra.mxu0 %v390
      %450 = vmatpush.bf16.msra.mxu0 %v388
      %451 = vmatpush.bf16.msra.mxu0 %v386
      %452 = vmatpush.bf16.msra.mxu0 %v384
      %453 = vmatpush.bf16.msra.mxu0 %v382
      %454 = vmatmul.bf16.gmra.mxu0 %v250
      %v455 = vpop.f32.mrf.mxu0
      %v456 = vadd.f32 0.0, %v455
      %v457 = vpop.f32.mrf.mxu0
      %v458 = vadd.f32 0.0, %v457
      %459 = vmatmul.bf16.gmra.mxu0 %v252
      %v460 = vpop.f32.mrf.mxu0
      %v461 = vadd.f32 0.0, %v460
      %v462 = vpop.f32.mrf.mxu0
      %v463 = vadd.f32 0.0, %v462
      %464 = vdwg.mxu0
      %465 = vmatpush.bf16.msra.mxu0 %v412
      %466 = vmatpush.bf16.msra.mxu0 %v410
      %467 = vmatpush.bf16.msra.mxu0 %v408
      %468 = vmatpush.bf16.msra.mxu0 %v406
      %469 = vmatpush.bf16.msra.mxu0 %v404
      %470 = vmatpush.bf16.msra.mxu0 %v402
      %471 = vmatpush.bf16.msra.mxu0 %v400
      %472 = vmatpush.bf16.msra.mxu0 %v398
      %473 = vmatmul.bf16.gmra.mxu0 %v251
      %v474 = vpop.f32.mrf.mxu0
      %v475 = vadd.f32 %v456, %v474
      %v476 = vpop.f32.mrf.mxu0
      %v477 = vadd.f32 %v458, %v476
      %478 = vmatmul.bf16.gmra.mxu0 %v253
      %v479 = vpop.f32.mrf.mxu0
      %v480 = vadd.f32 %v461, %v479
      %v481 = vpop.f32.mrf.mxu0
      %v482 = vadd.f32 %v463, %v481
      %483 = vdwg.mxu0
      %484 = vmatpush.bf16.msra.mxu0 %v397
      %485 = vmatpush.bf16.msra.mxu0 %v395
      %486 = vmatpush.bf16.msra.mxu0 %v393
      %487 = vmatpush.bf16.msra.mxu0 %v391
      %488 = vmatpush.bf16.msra.mxu0 %v389
      %489 = vmatpush.bf16.msra.mxu0 %v387
      %490 = vmatpush.bf16.msra.mxu0 %v385
      %491 = vmatpush.bf16.msra.mxu0 %v383
      %492 = vmatmul.bf16.gmra.mxu0 %v250
      %v493 = vpop.f32.mrf.mxu0
      %v494 = vadd.f32 0.0, %v493
      %v495 = vpop.f32.mrf.mxu0
      %v496 = vadd.f32 0.0, %v495
      %497 = vmatmul.bf16.gmra.mxu0 %v252
      %v498 = vpop.f32.mrf.mxu0
      %v499 = vadd.f32 0.0, %v498
      %v500 = vpop.f32.mrf.mxu0
      %v501 = vadd.f32 0.0, %v500
      %502 = vdwg.mxu0
      %503 = vmatpush.bf16.msra.mxu0 %v413
      %504 = vmatpush.bf16.msra.mxu0 %v411
      %505 = vmatpush.bf16.msra.mxu0 %v409
      %506 = vmatpush.bf16.msra.mxu0 %v407
      %507 = vmatpush.bf16.msra.mxu0 %v405
      %508 = vmatpush.bf16.msra.mxu0 %v403
      %509 = vmatpush.bf16.msra.mxu0 %v401
      %510 = vmatpush.bf16.msra.mxu0 %v399
      %511 = vmatmul.bf16.gmra.mxu0 %v251
      %v512 = vpop.f32.mrf.mxu0
      %v513 = vadd.f32 %v494, %v512
      %v514 = vpop.f32.mrf.mxu0
      %v515 = vadd.f32 %v496, %v514
      %516 = vmatmul.bf16.gmra.mxu0 %v253
      %v517 = vpop.f32.mrf.mxu0
      %v518 = vadd.f32 %v499, %v517
      %v519 = vpop.f32.mrf.mxu0
      %v520 = vadd.f32 %v501, %v519
      %521 = vdwg.mxu0
      %522 = vst [vmem:[%s204] sm:$0xff] %v475
      %523 = vst [vmem:[%s204 + $0x8] sm:$0xff] %v513
      %524 = vst [vmem:[%s204 + $0x10] sm:$0xff] %v477
      %525 = vst [vmem:[%s204 + $0x18] sm:$0xff] %v515
      %526 = vst [vmem:[%s204 + $0x20] sm:$0xff] %v480
      %527 = vst [vmem:[%s204 + $0x28] sm:$0xff] %v518
      %528 = vst [vmem:[%s204 + $0x30] sm:$0xff] %v482
      %529 = vst [vmem:[%s204 + $0x38] sm:$0xff] %v520
      %s530 = smul.u32 4, %s15
      %p531 = scmp.lt.s32.totalorder %s530, 7
      %s532 = scalar_select %p531, %s530, 7
      %s533 = smul.addr %s532, 2
      %s534 = smul.addr %s533, 8
      %s535 = scalar_lea.vmem %s4, %s534
      // Predicated region
      $region37: #{projector_forward.5} parent=35 // pred_check
        %p536 = pneg %p122
      $region38: #{projector_forward.5} parent=35 // pred_check_branch
        %538 = sbr.rel (%p536) target = $region40
      $region39: #{projector_forward.5} parent=35 // pred_region
        %s539 = smul.u32 4, %s15
      $region40: #{projector_forward.5} parent=35 // pred_fallthru
        _
    $region36: #{projector_forward.5} parent=5 // pred_fallthru
      _
    %p540 = scmp.le.s32.totalorder 2, %s10
    // Predicated region
    $region41: #{projector_forward.5} parent=5 // pred_check
      %p541 = pneg %p540
    $region42: #{projector_forward.5} parent=5 // pred_check_branch
      %543 = sbr.rel (%p541) target = $region44
    $region43: #{projector_forward.5} parent=5 // pred_region
      %s544 = ssub.s32 %s10, 2
      // Predicated region
      $region45: #{projector_forward.5} parent=43 // pred_check
        %p545 = pneg %p128
      $region46: #{projector_forward.5} parent=43 // pred_check_branch
        %547 = sbr.rel (%p545) target = $region48
      $region47: #{projector_forward.5} parent=43 // pred_region
        %s548 = smul.u32 4, %s16
        %p549 = scmp.lt.s32.totalorder %s548, 7
        %s550 = scalar_select %p549, %s548, 7
        %s551 = smul.addr %s550, 2
        %s552 = smul.addr %s551, 8
        %s553 = scalar_lea.vmem %s4, %s552
      $region48: #{projector_forward.5} parent=43 // pred_fallthru
        _
    $region44: #{projector_forward.5} parent=5 // pred_fallthru
      _
  $region6: #{projector_forward.5} parent=0 // loop_footer
    %s14 = sadd.s32 1, %s10
  $region7: #{projector_forward.5} parent=0 // loop_footer_branch
    %9 = sbr.rel target = $region3
  $region8: #{projector_forward.5} parent=0 // loop_exit
    _

// kernel: projector_forward.4
$region0: #{projector_forward.4}
  #allocation0 [shape = 'u32[]', space=smem, size = 0x4, offset = 0x4, fixed_abs, tag = 'smem constant byte address 0x4 - core index']
  #allocation1 [shape = 'u32[72,128]{1,0:T(1,128)}', space=vmem, size = 0x9000, scoped, tag = 'internal scratch']
  %s0 = inlined_call_operand.vmem [shape: f32[64,256], index: 0, kind: input, shape index: {}]
  %s1 = inlined_call_operand.vmem [shape: f32[1,256], index: 1, kind: input, shape index: {}]
  %s2 = inlined_call_operand.vmem [shape: f32[1,256], index: 2, kind: input, shape index: {}]
  %s3 = inlined_call_operand.vmem [shape: bf16[256,256], index: 3, kind: input, shape index: {}]
  %s4 = inlined_call_operand.vmem [shape: f32[64,256], index: 4, kind: output, shape index: {0}]
  %s5 = inlined_call_operand.vmem [shape: f32[8,256], index: 5, kind: output, shape index: {1}]
  %6 = xla_tuple %s4, %s5
  %s7 = sld [smem:[#allocation0]]
  $region61: #{projector_forward.4} parent=0
    _
  %s9 = ssub.s32 1, %s7
  %s10 = scalar_select 0, %s9, %s7
  loop: start=0, step=1, limit=4
  $region2: #{projector_forward.4} parent=0 // loop_pre_header
    _
  $region3: #{projector_forward.4} parent=0 // loop_header
    %s12 = sphi 0, %s16
    %p13 = scmp.ge.s32.totalorder %s12, 4
    %s22 = sphi 0, %s24
    %s25 = sphi 0, %s22
    %s26 = sphi 0, %s25
    %s42 = sphi 0, %s26
    %s46 = sphi 0, %s46
    %s48 = sphi 0, %s46
    %s49 = sphi 0, %s48
    %s63 = sphi 0, %s49
    %s67 = sphi 0, %s67
    %s69 = sphi 0, %s67
    %s70 = sphi 0, %s69
    %s84 = sphi 0, %s70
    %s88 = sphi 0, %s88
    %s90 = sphi 0, %s88
    %s91 = sphi 0, %s90
    %s105 = sphi 0, %s91
    %s111 = sphi 0, %s113
    %s114 = sphi 0, %s111
    %s115 = sphi 0, %s114
    %s131 = sphi 0, %s115
    %s135 = sphi 0, %s135
    %s137 = sphi 0, %s135
    %s138 = sphi 0, %s137
    %s152 = sphi 0, %s138
  $region4: #{projector_forward.4} parent=0 // loop_header_branch
    %15 = sbr.rel (%p13) target = $region8
  $region5: #{projector_forward.4} parent=0 // loop_body
    %s17 = ssub.s32 %s12, 1
    %s18 = ssub.s32 %s12, 2
    %s19 = sadd.s32 %s12, 1
    %s20 = ssub.s32 %s12, %s19
    %p21 = scmp.eq.s32.totalorder %s20, 0
    %s23 = sadd.s32 %s22, 1
    %s24 = scalar_select %p21, %s22, %s23
    %p27 = pneg %p21
    %p28 = scmp.eq.s32.totalorder %s12, 1
    %p29 = por %p27, %p28
    %p30 = scmp.ne.s32.totalorder %s22, %s25
    %p31 = scmp.eq.s32.totalorder %s12, 0
    %p32 = por %p30, %p31
    %p33 = scmp.ne.s32.totalorder %s22, %s25
    %p34 = scmp.eq.s32.totalorder %s17, 1
    %p35 = por %p33, %p34
    %p36 = scmp.ne.s32.totalorder %s25, %s26
    %p37 = scmp.eq.s32.totalorder %s17, 0
    %p38 = por %p36, %p37
    %p39 = scmp.ne.s32.totalorder %s25, %s26
    %p40 = scmp.eq.s32.totalorder %s18, 1
    %p41 = por %p39, %p40
    %p43 = scmp.ne.s32.totalorder %s26, %s42
    %p44 = scmp.eq.s32.totalorder %s18, 0
    %p45 = por %p43, %p44
    %s47 = sadd.s32 %s46, 1
    %p50 = scmp.eq.s32.totalorder %s12, 1
    %p51 = scmp.ne.s32.totalorder %s46, %s48
    %p52 = scmp.eq.s32.totalorder %s12, 0
    %p53 = por %p51, %p52
    %p54 = scmp.ne.s32.totalorder %s46, %s48
    %p55 = scmp.eq.s32.totalorder %s17, 1
    %p56 = por %p54, %p55
    %p57 = scmp.ne.s32.totalorder %s48, %s49
    %p58 = scmp.eq.s32.totalorder %s17, 0
    %p59 = por %p57, %p58
    %p60 = scmp.ne.s32.totalorder %s48, %s49
    %p61 = scmp.eq.s32.totalorder %s18, 1
    %p62 = por %p60, %p61
    %p64 = scmp.ne.s32.totalorder %s49, %s63
    %p65 = scmp.eq.s32.totalorder %s18, 0
    %p66 = por %p64, %p65
    %s68 = sadd.s32 %s67, 1
    %p71 = scmp.eq.s32.totalorder %s12, 1
    %p72 = scmp.ne.s32.totalorder %s67, %s69
    %p73 = scmp.eq.s32.totalorder %s12, 0
    %p74 = por %p72, %p73
    %p75 = scmp.ne.s32.totalorder %s67, %s69
    %p76 = scmp.eq.s32.totalorder %s17, 1
    %p77 = por %p75, %p76
    %p78 = scmp.ne.s32.totalorder %s69, %s70
    %p79 = scmp.eq.s32.totalorder %s17, 0
    %p80 = por %p78, %p79
    %p81 = scmp.ne.s32.totalorder %s69, %s70
    %p82 = scmp.eq.s32.totalorder %s18, 1
    %p83 = por %p81, %p82
    %p85 = scmp.ne.s32.totalorder %s70, %s84
    %p86 = scmp.eq.s32.totalorder %s18, 0
    %p87 = por %p85, %p86
    %s89 = sadd.s32 %s88, 1
    %p92 = scmp.eq.s32.totalorder %s12, 1
    %p93 = scmp.ne.s32.totalorder %s88, %s90
    %p94 = scmp.eq.s32.totalorder %s12, 0
    %p95 = por %p93, %p94
    %p96 = scmp.ne.s32.totalorder %s88, %s90
    %p97 = scmp.eq.s32.totalorder %s17, 1
    %p98 = por %p96, %p97
    %p99 = scmp.ne.s32.totalorder %s90, %s91
    %p100 = scmp.eq.s32.totalorder %s17, 0
    %p101 = por %p99, %p100
    %p102 = scmp.ne.s32.totalorder %s90, %s91
    %p103 = scmp.eq.s32.totalorder %s18, 1
    %p104 = por %p102, %p103
    %p106 = scmp.ne.s32.totalorder %s91, %s105
    %p107 = scmp.eq.s32.totalorder %s18, 0
    %p108 = por %p106, %p107
    %s109 = ssub.s32 %s12, %s19
    %p110 = scmp.eq.s32.totalorder %s109, 0
    %s112 = sadd.s32 %s111, 1
    %s113 = scalar_select %p110, %s111, %s112
    %p116 = pneg %p110
    %p117 = scmp.eq.s32.totalorder %s12, 1
    %p118 = por %p116, %p117
    %p119 = scmp.ne.s32.totalorder %s111, %s114
    %p120 = scmp.eq.s32.totalorder %s12, 0
    %p121 = por %p119, %p120
    %p122 = scmp.ne.s32.totalorder %s111, %s114
    %p123 = scmp.eq.s32.totalorder %s17, 1
    %p124 = por %p122, %p123
    %p125 = scmp.ne.s32.totalorder %s114, %s115
    %p126 = scmp.eq.s32.totalorder %s17, 0
    %p127 = por %p125, %p126
    %p128 = scmp.ne.s32.totalorder %s114, %s115
    %p129 = scmp.eq.s32.totalorder %s18, 1
    %p130 = por %p128, %p129
    %p132 = scmp.ne.s32.totalorder %s115, %s131
    %p133 = scmp.eq.s32.totalorder %s18, 0
    %p134 = por %p132, %p133
    %s136 = sadd.s32 %s135, 1
    %p139 = scmp.eq.s32.totalorder %s12, 1
    %p140 = scmp.ne.s32.totalorder %s135, %s137
    %p141 = scmp.eq.s32.totalorder %s12, 0
    %p142 = por %p140, %p141
    %p143 = scmp.ne.s32.totalorder %s135, %s137
    %p144 = scmp.eq.s32.totalorder %s17, 1
    %p145 = por %p143, %p144
    %p146 = scmp.ne.s32.totalorder %s137, %s138
    %p147 = scmp.eq.s32.totalorder %s17, 0
    %p148 = por %p146, %p147
    %p149 = scmp.ne.s32.totalorder %s137, %s138
    %p150 = scmp.eq.s32.totalorder %s18, 1
    %p151 = por %p149, %p150
    %p153 = scmp.ne.s32.totalorder %s138, %s152
    %p154 = scmp.eq.s32.totalorder %s18, 0
    %p155 = por %p153, %p154
    %p156 = scmp.le.s32.totalorder 1, %s12
    %p157 = scmp.lt.s32.totalorder %s12, 3
    %p158 = pnand %p156, %p157
    %p159 = pneg %p158
    // Predicated region
    $region9: #{projector_forward.4} parent=5 // pred_check
      _
    $region10: #{projector_forward.4} parent=5 // pred_check_branch
      %161 = sbr.rel (%p158) target = $region12
    $region11: #{projector_forward.4} parent=5 // pred_region
      %s162 = ssub.s32 %s12, 1
      // Predicated region
      $region13: #{projector_forward.4} parent=11 // pred_check
        %p163 = pneg %p59
      $region14: #{projector_forward.4} parent=11 // pred_check_branch
        %165 = sbr.rel (%p163) target = $region16
      $region15: #{projector_forward.4} parent=11 // pred_region
        _
      $region16: #{projector_forward.4} parent=11 // pred_fallthru
        _
      // Predicated region
      $region17: #{projector_forward.4} parent=11 // pred_check
        %p166 = pneg %p80
      $region18: #{projector_forward.4} parent=11 // pred_check_branch
        %168 = sbr.rel (%p166) target = $region20
      $region19: #{projector_forward.4} parent=11 // pred_region
        _
      $region20: #{projector_forward.4} parent=11 // pred_fallthru
        _
      // Predicated region
      $region21: #{projector_forward.4} parent=11 // pred_check
        %p169 = pneg %p101
      $region22: #{projector_forward.4} parent=11 // pred_check_branch
        %171 = sbr.rel (%p169) target = $region24
      $region23: #{projector_forward.4} parent=11 // pred_region
        _
      $region24: #{projector_forward.4} parent=11 // pred_fallthru
        _
    $region12: #{projector_forward.4} parent=5 // pred_fallthru
      _
    %p172 = scmp.lt.s32.totalorder %s12, 2
    // Predicated region
    $region25: #{projector_forward.4} parent=5 // pred_check
      %p173 = pneg %p172
    $region26: #{projector_forward.4} parent=5 // pred_check_branch
      %175 = sbr.rel (%p173) target = $region28
    $region27: #{projector_forward.4} parent=5 // pred_region
      // Predicated region
      $region29: #{projector_forward.4} parent=27 // pred_check
        %p176 = pneg %p32
      $region30: #{projector_forward.4} parent=27 // pred_check_branch
        %178 = sbr.rel (%p176) target = $region32
      $region31: #{projector_forward.4} parent=27 // pred_region
        %s179 = smul.u32 4, %s12
        %p180 = scmp.lt.s32.totalorder %s179, 7
        %s181 = scalar_select %p180, %s179, 7
        %s182 = smul.addr %s181, 2
        %s183 = smul.addr %s182, 8
        %s184 = scalar_lea.vmem %s0, %s183
        %s185 = smul.u32 4, %s12
      $region32: #{projector_forward.4} parent=27 // pred_fallthru
        _
    $region28: #{projector_forward.4} parent=5 // pred_fallthru
      _
    %p186 = scmp.le.s32.totalorder 1, %s12
    %p187 = scmp.lt.s32.totalorder %s12, 3
    %p188 = pnand %p186, %p187
    %p189 = pneg %p188
    // Predicated region
    $region33: #{projector_forward.4} parent=5 // pred_check
      _
    $region34: #{projector_forward.4} parent=5 // pred_check_branch
      %191 = sbr.rel (%p188) target = $region36
    $region35: #{projector_forward.4} parent=5 // pred_region
      %s192 = ssub.s32 %s12, 1
      %s193 = smul.u32 4, %s17
      %p194 = scmp.lt.s32.totalorder %s193, 7
      %s195 = scalar_select %p194, %s193, 7
      %s196 = smul.addr %s195, 2
      %s197 = smul.addr %s196, 8
      %s198 = scalar_lea.vmem %s0, %s197
      %p199 = pneg %p38
      %p200 = pneg %p35
      %p201 = pneg %p59
      %p202 = pneg %p56
      %p203 = pneg %p80
      %p204 = pneg %p77
      %p205 = pneg %p101
      %p206 = pneg %p98
      %p207 = pneg %p127
      %p208 = pneg %p124
      %s209 = smul.u32 4, %s17
      %p210 = scmp.lt.s32.totalorder %s209, 7
      %s211 = scalar_select %p210, %s209, 7
      %s212 = smul.addr %s211, 2
      %s213 = smul.addr %s212, 8
      %s214 = scalar_lea.vmem %s4, %s213
      %p215 = pneg %p148
      %p216 = pneg %p145
      %s217 = smul.u32 4, %s17
      %p218 = scmp.lt.s32.totalorder %s217, 7
      %s219 = scalar_select %p218, %s217, 7
      %s220 = smul.addr %s219, 2
      %s221 = smul.addr %s220, 8
      %s222 = scalar_lea.vmem %s0, %s221
      %s223 = smul.u32 4, %s17
      %s224 = smul.u32 4, %s17
      %p225 = scmp.lt.s32.totalorder %s224, 7
      %s226 = scalar_select %p225, %s224, 7
      %s227 = smul.addr %s226, 2
      %s228 = smul.addr %s227, 8
      %s229 = scalar_lea.vmem %s4, %s228
      %s230 = smul.u32 4, %s17
      %p231 = scmp.eq.s32.totalorder %s17, 0
      // Predicated region
      $region37: #{projector_forward.4} parent=35 // pred_check
        %p232 = pneg %p231
      $region38: #{projector_forward.4} parent=35 // pred_check_branch
        %234 = sbr.rel (%p232) target = $region40
      $region39: #{projector_forward.4} parent=35 // pred_region
        %235 = vst [vmem:[%s5] sm:$0xff] 0.0
        %236 = vst [vmem:[%s5 + $0x8] sm:$0xff] 0.0
      $region40: #{projector_forward.4} parent=35 // pred_fallthru
        _
      %v237 = vld [vmem:[%s222] sm:$0xff]
      %v238 = vld [vmem:[%s222 + $0x8] sm:$0xff]
      %v239 = vld [vmem:[%s222 + $0x10] sm:$0xff]
      %v240 = vld [vmem:[%s222 + $0x18] sm:$0xff]
      %v241 = vld [vmem:[%s222 + $0x20] sm:$0xff]
      %v242 = vld [vmem:[%s222 + $0x28] sm:$0xff]
      %v243 = vld [vmem:[%s222 + $0x30] sm:$0xff]
      %v244 = vld [vmem:[%s222 + $0x38] sm:$0xff]
      %v245 = vld [vmem:[%s1] sm:$0x3]
      %v247 = vperm.slane %v245, 0
      %v248 = vperm.slane %v245, 1
      %v251 = vmul.f32 %v237, %v247
      %v252 = vmul.f32 %v238, %v248
      %v253 = vmul.f32 %v239, %v247
      %v254 = vmul.f32 %v240, %v248
      %v255 = vmul.f32 %v241, %v247
      %v256 = vmul.f32 %v242, %v248
      %v257 = vmul.f32 %v243, %v247
      %v258 = vmul.f32 %v244, %v248
      %v259 = vld [vmem:[%s2] sm:$0x3]
      %v261 = vperm.slane %v259, 0
      %v262 = vperm.slane %v259, 1
      %v265 = vadd.f32 %v251, %v261
      %v266 = vadd.f32 %v252, %v262
      %v267 = vadd.f32 %v253, %v261
      %v268 = vadd.f32 %v254, %v262
      %v269 = vadd.f32 %v255, %v261
      %v270 = vadd.f32 %v256, %v262
      %v271 = vadd.f32 %v257, %v261
      %v272 = vadd.f32 %v258, %v262
      %v273 = vmax.f32 %v265, 0.0
      %v274 = vmax.f32 %v266, 0.0
      %v275 = vmax.f32 %v267, 0.0
      %v276 = vmax.f32 %v268, 0.0
      %v277 = vmax.f32 %v269, 0.0
      %v278 = vmax.f32 %v270, 0.0
      %v279 = vmax.f32 %v271, 0.0
      %v280 = vmax.f32 %v272, 0.0
      %s281 = smul.u32 %s17, 32
      %v282 = vlaneseq
      %v283 = vshrl.u32 %v282, 7
      %v284 = vadd.s32 %v283, 8
      %v285 = vadd.s32 %v283, 16
      %v286 = vadd.s32 %v283, 24
      %v287 = vstv %s281
      %v288 = vadd.s32 %v287, %v283
      %v289 = vadd.s32 %v287, %v284
      %v290 = vadd.s32 %v287, %v285
      %v291 = vadd.s32 %v287, %v286
      %vm292 = vcmp.lt.s32.totalorder %v288, 50
      %vm293 = vcmp.lt.s32.totalorder %v289, 50
      %vm294 = vcmp.lt.s32.totalorder %v290, 50
      %vm295 = vcmp.lt.s32.totalorder %v291, 50
      %v296 = vsel %vm292, 1, 0
      %v297 = vsel %vm293, 1, 0
      %v298 = vsel %vm294, 1, 0
      %v299 = vsel %vm295, 1, 0
      %vm300 = vcmp.eq.s32.totalorder %v296, 1
      %vm301 = vcmp.eq.s32.totalorder %v297, 1
      %vm302 = vcmp.eq.s32.totalorder %v298, 1
      %vm303 = vcmp.eq.s32.totalorder %v299, 1
      %v304 = vsel %vm300, %v273, 0.0
      %v305 = vsel %vm300, %v274, 0.0
      %v306 = vsel %vm301, %v275, 0.0
      %v307 = vsel %vm301, %v276, 0.0
      %v308 = vsel %vm302, %v277, 0.0
      %v309 = vsel %vm302, %v278, 0.0
      %v310 = vsel %vm303, %v279, 0.0
      %v311 = vsel %vm303, %v280, 0.0
      %v312 = vpack.c.bf16 %v306, %v304
      %v313 = vpack.c.bf16 %v307, %v305
      %v314 = vpack.c.bf16 %v310, %v308
      %v315 = vpack.c.bf16 %v311, %v309
      %v316 = vld [vmem:[%s3] sm:$0xff]
      %v317 = vld [vmem:[%s3 + $0x8] sm:$0xff]
      %v318 = vld [vmem:[%s3 + $0x10] sm:$0xff]
      %v319 = vld [vmem:[%s3 + $0x18] sm:$0xff]
      %v320 = vld [vmem:[%s3 + $0x20] sm:$0xff]
      %v321 = vld [vmem:[%s3 + $0x28] sm:$0xff]
      %v322 = vld [vmem:[%s3 + $0x30] sm:$0xff]
      %v323 = vld [vmem:[%s3 + $0x38] sm:$0xff]
      %v324 = vld [vmem:[%s3 + $0x40] sm:$0xff]
      %v325 = vld [vmem:[%s3 + $0x48] sm:$0xff]
      %v326 = vld [vmem:[%s3 + $0x50] sm:$0xff]
      %v327 = vld [vmem:[%s3 + $0x58] sm:$0xff]
      %v328 = vld [vmem:[%s3 + $0x60] sm:$0xff]
      %v329 = vld [vmem:[%s3 + $0x68] sm:$0xff]
      %v330 = vld [vmem:[%s3 + $0x70] sm:$0xff]
      %v331 = vld [vmem:[%s3 + $0x78] sm:$0xff]
      %v332 = vld [vmem:[%s3 + $0x80] sm:$0xff]
      %v333 = vld [vmem:[%s3 + $0x88] sm:$0xff]
      %v334 = vld [vmem:[%s3 + $0x90] sm:$0xff]
      %v335 = vld [vmem:[%s3 + $0x98] sm:$0xff]
      %v336 = vld [vmem:[%s3 + $0xa0] sm:$0xff]
      %v337 = vld [vmem:[%s3 + $0xa8] sm:$0xff]
      %v338 = vld [vmem:[%s3 + $0xb0] sm:$0xff]
      %v339 = vld [vmem:[%s3 + $0xb8] sm:$0xff]
      %v340 = vld [vmem:[%s3 + $0xc0] sm:$0xff]
      %v341 = vld [vmem:[%s3 + $0xc8] sm:$0xff]
      %v342 = vld [vmem:[%s3 + $0xd0] sm:$0xff]
      %v343 = vld [vmem:[%s3 + $0xd8] sm:$0xff]
      %v344 = vld [vmem:[%s3 + $0xe0] sm:$0xff]
      %v345 = vld [vmem:[%s3 + $0xe8] sm:$0xff]
      %v346 = vld [vmem:[%s3 + $0xf0] sm:$0xff]
      %v347 = vld [vmem:[%s3 + $0xf8] sm:$0xff]
      %v380 = vunpack.c.l.b16 %v316
      %v381 = vunpack.c.h.b16 %v316
      %v382 = vunpack.c.l.b16 %v317
      %v383 = vunpack.c.h.b16 %v317
      %v384 = vunpack.c.l.b16 %v318
      %v385 = vunpack.c.h.b16 %v318
      %v386 = vunpack.c.l.b16 %v319
      %v387 = vunpack.c.h.b16 %v319
      %v388 = vunpack.c.l.b16 %v320
      %v389 = vunpack.c.h.b16 %v320
      %v390 = vunpack.c.l.b16 %v321
      %v391 = vunpack.c.h.b16 %v321
      %v392 = vunpack.c.l.b16 %v322
      %v393 = vunpack.c.h.b16 %v322
      %v394 = vunpack.c.l.b16 %v323
      %v395 = vunpack.c.h.b16 %v323
      %v396 = vunpack.c.l.b16 %v324
      %v397 = vunpack.c.h.b16 %v324
      %v398 = vunpack.c.l.b16 %v325
      %v399 = vunpack.c.h.b16 %v325
      %v400 = vunpack.c.l.b16 %v326
      %v401 = vunpack.c.h.b16 %v326
      %v402 = vunpack.c.l.b16 %v327
      %v403 = vunpack.c.h.b16 %v327
      %v404 = vunpack.c.l.b16 %v328
      %v405 = vunpack.c.h.b16 %v328
      %v406 = vunpack.c.l.b16 %v329
      %v407 = vunpack.c.h.b16 %v329
      %v408 = vunpack.c.l.b16 %v330
      %v409 = vunpack.c.h.b16 %v330
      %v410 = vunpack.c.l.b16 %v331
      %v411 = vunpack.c.h.b16 %v331
      %v412 = vunpack.c.l.b16 %v332
      %v413 = vunpack.c.h.b16 %v332
      %v414 = vunpack.c.l.b16 %v333
      %v415 = vunpack.c.h.b16 %v333
      %v416 = vunpack.c.l.b16 %v334
      %v417 = vunpack.c.h.b16 %v334
      %v418 = vunpack.c.l.b16 %v335
      %v419 = vunpack.c.h.b16 %v335
      %v420 = vunpack.c.l.b16 %v336
      %v421 = vunpack.c.h.b16 %v336
      %v422 = vunpack.c.l.b16 %v337
      %v423 = vunpack.c.h.b16 %v337
      %v424 = vunpack.c.l.b16 %v338
      %v425 = vunpack.c.h.b16 %v338
      %v426 = vunpack.c.l.b16 %v339
      %v427 = vunpack.c.h.b16 %v339
      %v428 = vunpack.c.l.b16 %v340
      %v429 = vunpack.c.h.b16 %v340
      %v430 = vunpack.c.l.b16 %v341
      %v431 = vunpack.c.h.b16 %v341
      %v432 = vunpack.c.l.b16 %v342
      %v433 = vunpack.c.h.b16 %v342
      %v434 = vunpack.c.l.b16 %v343
      %v435 = vunpack.c.h.b16 %v343
      %v436 = vunpack.c.l.b16 %v344
      %v437 = vunpack.c.h.b16 %v344
      %v438 = vunpack.c.l.b16 %v345
      %v439 = vunpack.c.h.b16 %v345
      %v440 = vunpack.c.l.b16 %v346
      %v441 = vunpack.c.h.b16 %v346
      %v442 = vunpack.c.l.b16 %v347
      %v443 = vunpack.c.h.b16 %v347
      %v444 = vpack.c.b16 %v382, %v380
      %v445 = vpack.c.b16 %v383, %v381
      %v446 = vpack.c.b16 %v386, %v384
      %v447 = vpack.c.b16 %v387, %v385
      %v448 = vpack.c.b16 %v390, %v388
      %v449 = vpack.c.b16 %v391, %v389
      %v450 = vpack.c.b16 %v394, %v392
      %v451 = vpack.c.b16 %v395, %v393
      %v452 = vpack.c.b16 %v398, %v396
      %v453 = vpack.c.b16 %v399, %v397
      %v454 = vpack.c.b16 %v402, %v400
      %v455 = vpack.c.b16 %v403, %v401
      %v456 = vpack.c.b16 %v406, %v404
      %v457 = vpack.c.b16 %v407, %v405
      %v458 = vpack.c.b16 %v410, %v408
      %v459 = vpack.c.b16 %v411, %v409
      %v460 = vpack.c.b16 %v414, %v412
      %v461 = vpack.c.b16 %v415, %v413
      %v462 = vpack.c.b16 %v418, %v416
      %v463 = vpack.c.b16 %v419, %v417
      %v464 = vpack.c.b16 %v422, %v420
      %v465 = vpack.c.b16 %v423, %v421
      %v466 = vpack.c.b16 %v426, %v424
      %v467 = vpack.c.b16 %v427, %v425
      %v468 = vpack.c.b16 %v430, %v428
      %v469 = vpack.c.b16 %v431, %v429
      %v470 = vpack.c.b16 %v434, %v432
      %v471 = vpack.c.b16 %v435, %v433
      %v472 = vpack.c.b16 %v438, %v436
      %v473 = vpack.c.b16 %v439, %v437
      %v474 = vpack.c.b16 %v442, %v440
      %v475 = vpack.c.b16 %v443, %v441
      %508 = vmatpush.bf16.msra.mxu0 %v458
      %509 = vmatpush.bf16.msra.mxu0 %v456
      %510 = vmatpush.bf16.msra.mxu0 %v454
      %511 = vmatpush.bf16.msra.mxu0 %v452
      %512 = vmatpush.bf16.msra.mxu0 %v450
      %513 = vmatpush.bf16.msra.mxu0 %v448
      %514 = vmatpush.bf16.msra.mxu0 %v446
      %515 = vmatpush.bf16.msra.mxu0 %v444
      %516 = vmatmul.bf16.gmra.mxu0 %v312
      %v517 = vpop.f32.mrf.mxu0
      %v518 = vadd.f32 0.0, %v517
      %v519 = vpop.f32.mrf.mxu0
      %v520 = vadd.f32 0.0, %v519
      %521 = vmatmul.bf16.gmra.mxu0 %v314
      %v522 = vpop.f32.mrf.mxu0
      %v523 = vadd.f32 0.0, %v522
      %v524 = vpop.f32.mrf.mxu0
      %v525 = vadd.f32 0.0, %v524
      %526 = vdwg.mxu0
      %527 = vmatpush.bf16.msra.mxu0 %v474
      %528 = vmatpush.bf16.msra.mxu0 %v472
      %529 = vmatpush.bf16.msra.mxu0 %v470
      %530 = vmatpush.bf16.msra.mxu0 %v468
      %531 = vmatpush.bf16.msra.mxu0 %v466
      %532 = vmatpush.bf16.msra.mxu0 %v464
      %533 = vmatpush.bf16.msra.mxu0 %v462
      %534 = vmatpush.bf16.msra.mxu0 %v460
      %535 = vmatmul.bf16.gmra.mxu0 %v313
      %v536 = vpop.f32.mrf.mxu0
      %v537 = vadd.f32 %v518, %v536
      %v538 = vpop.f32.mrf.mxu0
      %v539 = vadd.f32 %v520, %v538
      %540 = vmatmul.bf16.gmra.mxu0 %v315
      %v541 = vpop.f32.mrf.mxu0
      %v542 = vadd.f32 %v523, %v541
      %v543 = vpop.f32.mrf.mxu0
      %v544 = vadd.f32 %v525, %v543
      %545 = vdwg.mxu0
      %546 = vmatpush.bf16.msra.mxu0 %v459
      %547 = vmatpush.bf16.msra.mxu0 %v457
      %548 = vmatpush.bf16.msra.mxu0 %v455
      %549 = vmatpush.bf16.msra.mxu0 %v453
      %550 = vmatpush.bf16.msra.mxu0 %v451
      %551 = vmatpush.bf16.msra.mxu0 %v449
      %552 = vmatpush.bf16.msra.mxu0 %v447
      %553 = vmatpush.bf16.msra.mxu0 %v445
      %554 = vmatmul.bf16.gmra.mxu0 %v312
      %v555 = vpop.f32.mrf.mxu0
      %v556 = vadd.f32 0.0, %v555
      %v557 = vpop.f32.mrf.mxu0
      %v558 = vadd.f32 0.0, %v557
      %559 = vmatmul.bf16.gmra.mxu0 %v314
      %v560 = vpop.f32.mrf.mxu0
      %v561 = vadd.f32 0.0, %v560
      %v562 = vpop.f32.mrf.mxu0
      %v563 = vadd.f32 0.0, %v562
      %564 = vdwg.mxu0
      %565 = vmatpush.bf16.msra.mxu0 %v475
      %566 = vmatpush.bf16.msra.mxu0 %v473
      %567 = vmatpush.bf16.msra.mxu0 %v471
      %568 = vmatpush.bf16.msra.mxu0 %v469
      %569 = vmatpush.bf16.msra.mxu0 %v467
      %570 = vmatpush.bf16.msra.mxu0 %v465
      %571 = vmatpush.bf16.msra.mxu0 %v463
      %572 = vmatpush.bf16.msra.mxu0 %v461
      %573 = vmatmul.bf16.gmra.mxu0 %v313
      %v574 = vpop.f32.mrf.mxu0
      %v575 = vadd.f32 %v556, %v574
      %v576 = vpop.f32.mrf.mxu0
      %v577 = vadd.f32 %v558, %v576
      %578 = vmatmul.bf16.gmra.mxu0 %v315
      %v579 = vpop.f32.mrf.mxu0
      %v580 = vadd.f32 %v561, %v579
      %v581 = vpop.f32.mrf.mxu0
      %v582 = vadd.f32 %v563, %v581
      %583 = vdwg.mxu0
      %584 = vst [vmem:[%s229] sm:$0xff] %v537
      %585 = vst [vmem:[%s229 + $0x8] sm:$0xff] %v575
      %586 = vst [vmem:[%s229 + $0x10] sm:$0xff] %v539
      %587 = vst [vmem:[%s229 + $0x18] sm:$0xff] %v577
      %588 = vst [vmem:[%s229 + $0x20] sm:$0xff] %v542
      %589 = vst [vmem:[%s229 + $0x28] sm:$0xff] %v580
      %590 = vst [vmem:[%s229 + $0x30] sm:$0xff] %v544
      %591 = vst [vmem:[%s229 + $0x38] sm:$0xff] %v582
      %v592 = vld [vmem:[%s5] ss:$8 sm:$0x3]
      %v593 = vadd.f32 %v537, %v539
      %v594 = vadd.f32 %v593, %v542
      %v595 = vadd.f32 %v594, %v544
      %v596 = vrot.slane %v595, 4
      %v597 = vadd.f32 %v595, %v596
      %v598 = vrot.slane %v597, 2
      %v599 = vadd.f32 %v597, %v598
      %v600 = vrot.slane %v599, 1
      %v601 = vadd.f32 %v599, %v600
      %v602 = vadd.f32 %v575, %v577
      %v603 = vadd.f32 %v602, %v580
      %v604 = vadd.f32 %v603, %v582
      %v605 = vrot.slane %v604, 4
      %v606 = vadd.f32 %v604, %v605
      %v607 = vrot.slane %v606, 2
      %v608 = vadd.f32 %v606, %v607
      %v609 = vrot.slane %v608, 1
      %v610 = vadd.f32 %v608, %v609
      %v613 = vrot.slane %v610, 7
      %vm614 = vcmask 1040384
      %v615 = vsel %vm614, %v601, %v613
      %v617 = vadd.f32 %v592, %v615
      %v618 = vlaneseq
      %vm619 = vcmp.ge.s32.totalorder %v618, 0
      %vm620 = vcmp.lt.s32.totalorder %v618, 256
      %vm621 = vmand %vm619, %vm620
      %622 = vst.msk [vmem:[%s5] ss:$8 sm:$0x3] %vm621, %v617
      %623 = vst.msk [vmem:[%s5] ss:$8 sm:$0x0] %vm621, %v617
      %s624 = scalar_lea.vmem %s5, 1
      %v625 = vld [vmem:[%s624] ss:$8 sm:$0x3]
      %v626 = vmul.f32 %v537, %v537
      %v627 = vmul.f32 %v575, %v575
      %v628 = vmul.f32 %v539, %v539
      %v629 = vmul.f32 %v577, %v577
      %v630 = vmul.f32 %v542, %v542
      %v631 = vmul.f32 %v580, %v580
      %v632 = vmul.f32 %v544, %v544
      %v633 = vmul.f32 %v582, %v582
      %v634 = vadd.f32 %v626, %v628
      %v635 = vadd.f32 %v634, %v630
      %v636 = vadd.f32 %v635, %v632
      %v637 = vrot.slane %v636, 4
      %v638 = vadd.f32 %v636, %v637
      %v639 = vrot.slane %v638, 2
      %v640 = vadd.f32 %v638, %v639
      %v641 = vrot.slane %v640, 1
      %v642 = vadd.f32 %v640, %v641
      %v643 = vadd.f32 %v627, %v629
      %v644 = vadd.f32 %v643, %v631
      %v645 = vadd.f32 %v644, %v633
      %v646 = vrot.slane %v645, 4
      %v647 = vadd.f32 %v645, %v646
      %v648 = vrot.slane %v647, 2
      %v649 = vadd.f32 %v647, %v648
      %v650 = vrot.slane %v649, 1
      %v651 = vadd.f32 %v649, %v650
      %v654 = vrot.slane %v651, 7
      %v655 = vsel %vm614, %v642, %v654
      %v657 = vadd.f32 %v625, %v655
      %658 = vst.msk [vmem:[%s624] ss:$8 sm:$0x3] %vm621, %v657
      %659 = vst.msk [vmem:[%s624] ss:$8 sm:$0x0] %vm621, %v657
      %s660 = smul.u32 4, %s17
      %p661 = scmp.lt.s32.totalorder %s660, 7
      %s662 = scalar_select %p661, %s660, 7
      %s663 = smul.addr %s662, 2
      %s664 = smul.addr %s663, 8
      %s665 = scalar_lea.vmem %s4, %s664
      // Predicated region
      $region41: #{projector_forward.4} parent=35 // pred_check
        %p666 = pneg %p124
      $region42: #{projector_forward.4} parent=35 // pred_check_branch
        %668 = sbr.rel (%p666) target = $region44
      $region43: #{projector_forward.4} parent=35 // pred_region
        %s669 = smul.u32 4, %s17
      $region44: #{projector_forward.4} parent=35 // pred_fallthru
        _
      // Predicated region
      $region45: #{projector_forward.4} parent=35 // pred_check
        %p670 = pneg %p145
      $region46: #{projector_forward.4} parent=35 // pred_check_branch
        %672 = sbr.rel (%p670) target = $region48
      $region47: #{projector_forward.4} parent=35 // pred_region
        _
      $region48: #{projector_forward.4} parent=35 // pred_fallthru
        _
      // Predicated region
      $region49: #{projector_forward.4} parent=35 // pred_check
        %p673 = pneg %p145
      $region50: #{projector_forward.4} parent=35 // pred_check_branch
        %675 = sbr.rel (%p673) target = $region52
      $region51: #{projector_forward.4} parent=35 // pred_region
        _
      $region52: #{projector_forward.4} parent=35 // pred_fallthru
        _
    $region36: #{projector_forward.4} parent=5 // pred_fallthru
      _
    %p676 = scmp.le.s32.totalorder 2, %s12
    // Predicated region
    $region53: #{projector_forward.4} parent=5 // pred_check
      %p677 = pneg %p676
    $region54: #{projector_forward.4} parent=5 // pred_check_branch
      %679 = sbr.rel (%p677) target = $region56
    $region55: #{projector_forward.4} parent=5 // pred_region
      %s680 = ssub.s32 %s12, 2
      // Predicated region
      $region57: #{projector_forward.4} parent=55 // pred_check
        %p681 = pneg %p130
      $region58: #{projector_forward.4} parent=55 // pred_check_branch
        %683 = sbr.rel (%p681) target = $region60
      $region59: #{projector_forward.4} parent=55 // pred_region
        %s684 = smul.u32 4, %s18
        %p685 = scmp.lt.s32.totalorder %s684, 7
        %s686 = scalar_select %p685, %s684, 7
        %s687 = smul.addr %s686, 2
        %s688 = smul.addr %s687, 8
        %s689 = scalar_lea.vmem %s4, %s688
      $region60: #{projector_forward.4} parent=55 // pred_fallthru
        _
    $region56: #{projector_forward.4} parent=5 // pred_fallthru
      _
  $region6: #{projector_forward.4} parent=0 // loop_footer
    %s16 = sadd.s32 1, %s12
  $region7: #{projector_forward.4} parent=0 // loop_footer_branch
    %11 = sbr.rel target = $region3
  $region8: #{projector_forward.4} parent=0 // loop_exit
    _

// kernel: projector_forward.3
$region0: #{projector_forward.3}
  #allocation0 [shape = 'u32[]', space=smem, size = 0x4, offset = 0x4, fixed_abs, tag = 'smem constant byte address 0x4 - core index']
  #allocation1 [shape = 'u32[72,128]{1,0:T(1,128)}', space=vmem, size = 0x9000, scoped, tag = 'internal scratch']
  %s0 = inlined_call_operand.vmem [shape: bf16[64,256], index: 0, kind: input, shape index: {}]
  %s1 = inlined_call_operand.vmem [shape: bf16[256,256], index: 1, kind: input, shape index: {}]
  %s2 = inlined_call_operand.vmem [shape: f32[64,256], index: 2, kind: output, shape index: {0}]
  %s3 = inlined_call_operand.vmem [shape: f32[8,256], index: 3, kind: output, shape index: {1}]
  %4 = xla_tuple %s2, %s3
  %s5 = sld [smem:[#allocation0]]
  $region53: #{projector_forward.3} parent=0
    _
  %s7 = ssub.s32 1, %s5
  %s8 = scalar_select 0, %s7, %s5
  loop: start=0, step=1, limit=4
  $region2: #{projector_forward.3} parent=0 // loop_pre_header
    _
  $region3: #{projector_forward.3} parent=0 // loop_header
    %s10 = sphi 0, %s14
    %p11 = scmp.ge.s32.totalorder %s10, 4
    %s20 = sphi 0, %s22
    %s23 = sphi 0, %s20
    %s24 = sphi 0, %s23
    %s40 = sphi 0, %s24
    %s44 = sphi 0, %s44
    %s46 = sphi 0, %s44
    %s47 = sphi 0, %s46
    %s61 = sphi 0, %s47
    %s67 = sphi 0, %s69
    %s70 = sphi 0, %s67
    %s71 = sphi 0, %s70
    %s87 = sphi 0, %s71
    %s91 = sphi 0, %s91
    %s93 = sphi 0, %s91
    %s94 = sphi 0, %s93
    %s108 = sphi 0, %s94
  $region4: #{projector_forward.3} parent=0 // loop_header_branch
    %13 = sbr.rel (%p11) target = $region8
  $region5: #{projector_forward.3} parent=0 // loop_body
    %s15 = ssub.s32 %s10, 1
    %s16 = ssub.s32 %s10, 2
    %s17 = sadd.s32 %s10, 1
    %s18 = ssub.s32 %s10, %s17
    %p19 = scmp.eq.s32.totalorder %s18, 0
    %s21 = sadd.s32 %s20, 1
    %s22 = scalar_select %p19, %s20, %s21
    %p25 = pneg %p19
    %p26 = scmp.eq.s32.totalorder %s10, 1
    %p27 = por %p25, %p26
    %p28 = scmp.ne.s32.totalorder %s20, %s23
    %p29 = scmp.eq.s32.totalorder %s10, 0
    %p30 = por %p28, %p29
    %p31 = scmp.ne.s32.totalorder %s20, %s23
    %p32 = scmp.eq.s32.totalorder %s15, 1
    %p33 = por %p31, %p32
    %p34 = scmp.ne.s32.totalorder %s23, %s24
    %p35 = scmp.eq.s32.totalorder %s15, 0
    %p36 = por %p34, %p35
    %p37 = scmp.ne.s32.totalorder %s23, %s24
    %p38 = scmp.eq.s32.totalorder %s16, 1
    %p39 = por %p37, %p38
    %p41 = scmp.ne.s32.totalorder %s24, %s40
    %p42 = scmp.eq.s32.totalorder %s16, 0
    %p43 = por %p41, %p42
    %s45 = sadd.s32 %s44, 1
    %p48 = scmp.eq.s32.totalorder %s10, 1
    %p49 = scmp.ne.s32.totalorder %s44, %s46
    %p50 = scmp.eq.s32.totalorder %s10, 0
    %p51 = por %p49, %p50
    %p52 = scmp.ne.s32.totalorder %s44, %s46
    %p53 = scmp.eq.s32.totalorder %s15, 1
    %p54 = por %p52, %p53
    %p55 = scmp.ne.s32.totalorder %s46, %s47
    %p56 = scmp.eq.s32.totalorder %s15, 0
    %p57 = por %p55, %p56
    %p58 = scmp.ne.s32.totalorder %s46, %s47
    %p59 = scmp.eq.s32.totalorder %s16, 1
    %p60 = por %p58, %p59
    %p62 = scmp.ne.s32.totalorder %s47, %s61
    %p63 = scmp.eq.s32.totalorder %s16, 0
    %p64 = por %p62, %p63
    %s65 = ssub.s32 %s10, %s17
    %p66 = scmp.eq.s32.totalorder %s65, 0
    %s68 = sadd.s32 %s67, 1
    %s69 = scalar_select %p66, %s67, %s68
    %p72 = pneg %p66
    %p73 = scmp.eq.s32.totalorder %s10, 1
    %p74 = por %p72, %p73
    %p75 = scmp.ne.s32.totalorder %s67, %s70
    %p76 = scmp.eq.s32.totalorder %s10, 0
    %p77 = por %p75, %p76
    %p78 = scmp.ne.s32.totalorder %s67, %s70
    %p79 = scmp.eq.s32.totalorder %s15, 1
    %p80 = por %p78, %p79
    %p81 = scmp.ne.s32.totalorder %s70, %s71
    %p82 = scmp.eq.s32.totalorder %s15, 0
    %p83 = por %p81, %p82
    %p84 = scmp.ne.s32.totalorder %s70, %s71
    %p85 = scmp.eq.s32.totalorder %s16, 1
    %p86 = por %p84, %p85
    %p88 = scmp.ne.s32.totalorder %s71, %s87
    %p89 = scmp.eq.s32.totalorder %s16, 0
    %p90 = por %p88, %p89
    %s92 = sadd.s32 %s91, 1
    %p95 = scmp.eq.s32.totalorder %s10, 1
    %p96 = scmp.ne.s32.totalorder %s91, %s93
    %p97 = scmp.eq.s32.totalorder %s10, 0
    %p98 = por %p96, %p97
    %p99 = scmp.ne.s32.totalorder %s91, %s93
    %p100 = scmp.eq.s32.totalorder %s15, 1
    %p101 = por %p99, %p100
    %p102 = scmp.ne.s32.totalorder %s93, %s94
    %p103 = scmp.eq.s32.totalorder %s15, 0
    %p104 = por %p102, %p103
    %p105 = scmp.ne.s32.totalorder %s93, %s94
    %p106 = scmp.eq.s32.totalorder %s16, 1
    %p107 = por %p105, %p106
    %p109 = scmp.ne.s32.totalorder %s94, %s108
    %p110 = scmp.eq.s32.totalorder %s16, 0
    %p111 = por %p109, %p110
    %p112 = scmp.le.s32.totalorder 1, %s10
    %p113 = scmp.lt.s32.totalorder %s10, 3
    %p114 = pnand %p112, %p113
    %p115 = pneg %p114
    // Predicated region
    $region9: #{projector_forward.3} parent=5 // pred_check
      _
    $region10: #{projector_forward.3} parent=5 // pred_check_branch
      %117 = sbr.rel (%p114) target = $region12
    $region11: #{projector_forward.3} parent=5 // pred_region
      %s118 = ssub.s32 %s10, 1
      // Predicated region
      $region13: #{projector_forward.3} parent=11 // pred_check
        %p119 = pneg %p57
      $region14: #{projector_forward.3} parent=11 // pred_check_branch
        %121 = sbr.rel (%p119) target = $region16
      $region15: #{projector_forward.3} parent=11 // pred_region
        _
      $region16: #{projector_forward.3} parent=11 // pred_fallthru
        _
    $region12: #{projector_forward.3} parent=5 // pred_fallthru
      _
    %p122 = scmp.lt.s32.totalorder %s10, 2
    // Predicated region
    $region17: #{projector_forward.3} parent=5 // pred_check
      %p123 = pneg %p122
    $region18: #{projector_forward.3} parent=5 // pred_check_branch
      %125 = sbr.rel (%p123) target = $region20
    $region19: #{projector_forward.3} parent=5 // pred_region
      // Predicated region
      $region21: #{projector_forward.3} parent=19 // pred_check
        %p126 = pneg %p30
      $region22: #{projector_forward.3} parent=19 // pred_check_branch
        %128 = sbr.rel (%p126) target = $region24
      $region23: #{projector_forward.3} parent=19 // pred_region
        %s129 = smul.u32 4, %s10
        %p130 = scmp.lt.s32.totalorder %s129, 7
        %s131 = scalar_select %p130, %s129, 7
        %s132 = smul.addr %s131, 2
        %s133 = smul.addr %s132, 4
        %s134 = scalar_lea.vmem %s0, %s133
        %s135 = smul.u32 4, %s10
      $region24: #{projector_forward.3} parent=19 // pred_fallthru
        _
    $region20: #{projector_forward.3} parent=5 // pred_fallthru
      _
    %p136 = scmp.le.s32.totalorder 1, %s10
    %p137 = scmp.lt.s32.totalorder %s10, 3
    %p138 = pnand %p136, %p137
    %p139 = pneg %p138
    // Predicated region
    $region25: #{projector_forward.3} parent=5 // pred_check
      _
    $region26: #{projector_forward.3} parent=5 // pred_check_branch
      %141 = sbr.rel (%p138) target = $region28
    $region27: #{projector_forward.3} parent=5 // pred_region
      %s142 = ssub.s32 %s10, 1
      %s143 = smul.u32 4, %s15
      %p144 = scmp.lt.s32.totalorder %s143, 7
      %s145 = scalar_select %p144, %s143, 7
      %s146 = smul.addr %s145, 2
      %s147 = smul.addr %s146, 4
      %s148 = scalar_lea.vmem %s0, %s147
      %p149 = pneg %p36
      %p150 = pneg %p33
      %p151 = pneg %p57
      %p152 = pneg %p54
      %p153 = pneg %p83
      %p154 = pneg %p80
      %s155 = smul.u32 4, %s15
      %p156 = scmp.lt.s32.totalorder %s155, 7
      %s157 = scalar_select %p156, %s155, 7
      %s158 = smul.addr %s157, 2
      %s159 = smul.addr %s158, 8
      %s160 = scalar_lea.vmem %s2, %s159
      %p161 = pneg %p104
      %p162 = pneg %p101
      %s163 = smul.u32 4, %s15
      %p164 = scmp.lt.s32.totalorder %s163, 7
      %s165 = scalar_select %p164, %s163, 7
      %s166 = smul.addr %s165, 2
      %s167 = smul.addr %s166, 4
      %s168 = scalar_lea.vmem %s0, %s167
      %s169 = smul.u32 4, %s15
      %s170 = smul.u32 4, %s15
      %p171 = scmp.lt.s32.totalorder %s170, 7
      %s172 = scalar_select %p171, %s170, 7
      %s173 = smul.addr %s172, 2
      %s174 = smul.addr %s173, 8
      %s175 = scalar_lea.vmem %s2, %s174
      %s176 = smul.u32 4, %s15
      %p177 = scmp.eq.s32.totalorder %s15, 0
      // Predicated region
      $region29: #{projector_forward.3} parent=27 // pred_check
        %p178 = pneg %p177
      $region30: #{projector_forward.3} parent=27 // pred_check_branch
        %180 = sbr.rel (%p178) target = $region32
      $region31: #{projector_forward.3} parent=27 // pred_region
        %181 = vst [vmem:[%s3] sm:$0xff] 0.0
        %182 = vst [vmem:[%s3 + $0x8] sm:$0xff] 0.0
      $region32: #{projector_forward.3} parent=27 // pred_fallthru
        _
      %v183 = vld [vmem:[%s168] sm:$0xff]
      %v184 = vld [vmem:[%s168 + $0x8] sm:$0xff]
      %v185 = vld [vmem:[%s168 + $0x10] sm:$0xff]
      %v186 = vld [vmem:[%s168 + $0x18] sm:$0xff]
      %v187 = vld [vmem:[%s1] sm:$0xff]
      %v188 = vld [vmem:[%s1 + $0x8] sm:$0xff]
      %v189 = vld [vmem:[%s1 + $0x10] sm:$0xff]
      %v190 = vld [vmem:[%s1 + $0x18] sm:$0xff]
      %v191 = vld [vmem:[%s1 + $0x20] sm:$0xff]
      %v192 = vld [vmem:[%s1 + $0x28] sm:$0xff]
      %v193 = vld [vmem:[%s1 + $0x30] sm:$0xff]
      %v194 = vld [vmem:[%s1 + $0x38] sm:$0xff]
      %v195 = vld [vmem:[%s1 + $0x40] sm:$0xff]
      %v196 = vld [vmem:[%s1 + $0x48] sm:$0xff]
      %v197 = vld [vmem:[%s1 + $0x50] sm:$0xff]
      %v198 = vld [vmem:[%s1 + $0x58] sm:$0xff]
      %v199 = vld [vmem:[%s1 + $0x60] sm:$0xff]
      %v200 = vld [vmem:[%s1 + $0x68] sm:$0xff]
      %v201 = vld [vmem:[%s1 + $0x70] sm:$0xff]
      %v202 = vld [vmem:[%s1 + $0x78] sm:$0xff]
      %v203 = vld [vmem:[%s1 + $0x80] sm:$0xff]
      %v204 = vld [vmem:[%s1 + $0x88] sm:$0xff]
      %v205 = vld [vmem:[%s1 + $0x90] sm:$0xff]
      %v206 = vld [vmem:[%s1 + $0x98] sm:$0xff]
      %v207 = vld [vmem:[%s1 + $0xa0] sm:$0xff]
      %v208 = vld [vmem:[%s1 + $0xa8] sm:$0xff]
      %v209 = vld [vmem:[%s1 + $0xb0] sm:$0xff]
      %v210 = vld [vmem:[%s1 + $0xb8] sm:$0xff]
      %v211 = vld [vmem:[%s1 + $0xc0] sm:$0xff]
      %v212 = vld [vmem:[%s1 + $0xc8] sm:$0xff]
      %v213 = vld [vmem:[%s1 + $0xd0] sm:$0xff]
      %v214 = vld [vmem:[%s1 + $0xd8] sm:$0xff]
      %v215 = vld [vmem:[%s1 + $0xe0] sm:$0xff]
      %v216 = vld [vmem:[%s1 + $0xe8] sm:$0xff]
      %v217 = vld [vmem:[%s1 + $0xf0] sm:$0xff]
      %v218 = vld [vmem:[%s1 + $0xf8] sm:$0xff]
      %v223 = vunpack.c.l.b16 %v183
      %v224 = vunpack.c.h.b16 %v183
      %v225 = vunpack.c.l.b16 %v184
      %v226 = vunpack.c.h.b16 %v184
      %v227 = vunpack.c.l.b16 %v185
      %v228 = vunpack.c.h.b16 %v185
      %v229 = vunpack.c.l.b16 %v186
      %v230 = vunpack.c.h.b16 %v186
      %v231 = vpack.c.b16 %v225, %v223
      %v232 = vpack.c.b16 %v226, %v224
      %v233 = vpack.c.b16 %v229, %v227
      %v234 = vpack.c.b16 %v230, %v228
      %v271 = vunpack.c.l.b16 %v187
      %v272 = vunpack.c.h.b16 %v187
      %v273 = vunpack.c.l.b16 %v188
      %v274 = vunpack.c.h.b16 %v188
      %v275 = vunpack.c.l.b16 %v189
      %v276 = vunpack.c.h.b16 %v189
      %v277 = vunpack.c.l.b16 %v190
      %v278 = vunpack.c.h.b16 %v190
      %v279 = vunpack.c.l.b16 %v191
      %v280 = vunpack.c.h.b16 %v191
      %v281 = vunpack.c.l.b16 %v192
      %v282 = vunpack.c.h.b16 %v192
      %v283 = vunpack.c.l.b16 %v193
      %v284 = vunpack.c.h.b16 %v193
      %v285 = vunpack.c.l.b16 %v194
      %v286 = vunpack.c.h.b16 %v194
      %v287 = vunpack.c.l.b16 %v195
      %v288 = vunpack.c.h.b16 %v195
      %v289 = vunpack.c.l.b16 %v196
      %v290 = vunpack.c.h.b16 %v196
      %v291 = vunpack.c.l.b16 %v197
      %v292 = vunpack.c.h.b16 %v197
      %v293 = vunpack.c.l.b16 %v198
      %v294 = vunpack.c.h.b16 %v198
      %v295 = vunpack.c.l.b16 %v199
      %v296 = vunpack.c.h.b16 %v199
      %v297 = vunpack.c.l.b16 %v200
      %v298 = vunpack.c.h.b16 %v200
      %v299 = vunpack.c.l.b16 %v201
      %v300 = vunpack.c.h.b16 %v201
      %v301 = vunpack.c.l.b16 %v202
      %v302 = vunpack.c.h.b16 %v202
      %v303 = vunpack.c.l.b16 %v203
      %v304 = vunpack.c.h.b16 %v203
      %v305 = vunpack.c.l.b16 %v204
      %v306 = vunpack.c.h.b16 %v204
      %v307 = vunpack.c.l.b16 %v205
      %v308 = vunpack.c.h.b16 %v205
      %v309 = vunpack.c.l.b16 %v206
      %v310 = vunpack.c.h.b16 %v206
      %v311 = vunpack.c.l.b16 %v207
      %v312 = vunpack.c.h.b16 %v207
      %v313 = vunpack.c.l.b16 %v208
      %v314 = vunpack.c.h.b16 %v208
      %v315 = vunpack.c.l.b16 %v209
      %v316 = vunpack.c.h.b16 %v209
      %v317 = vunpack.c.l.b16 %v210
      %v318 = vunpack.c.h.b16 %v210
      %v319 = vunpack.c.l.b16 %v211
      %v320 = vunpack.c.h.b16 %v211
      %v321 = vunpack.c.l.b16 %v212
      %v322 = vunpack.c.h.b16 %v212
      %v323 = vunpack.c.l.b16 %v213
      %v324 = vunpack.c.h.b16 %v213
      %v325 = vunpack.c.l.b16 %v214
      %v326 = vunpack.c.h.b16 %v214
      %v327 = vunpack.c.l.b16 %v215
      %v328 = vunpack.c.h.b16 %v215
      %v329 = vunpack.c.l.b16 %v216
      %v330 = vunpack.c.h.b16 %v216
      %v331 = vunpack.c.l.b16 %v217
      %v332 = vunpack.c.h.b16 %v217
      %v333 = vunpack.c.l.b16 %v218
      %v334 = vunpack.c.h.b16 %v218
      %v335 = vpack.c.b16 %v273, %v271
      %v336 = vpack.c.b16 %v274, %v272
      %v337 = vpack.c.b16 %v277, %v275
      %v338 = vpack.c.b16 %v278, %v276
      %v339 = vpack.c.b16 %v281, %v279
      %v340 = vpack.c.b16 %v282, %v280
      %v341 = vpack.c.b16 %v285, %v283
      %v342 = vpack.c.b16 %v286, %v284
      %v343 = vpack.c.b16 %v289, %v287
      %v344 = vpack.c.b16 %v290, %v288
      %v345 = vpack.c.b16 %v293, %v291
      %v346 = vpack.c.b16 %v294, %v292
      %v347 = vpack.c.b16 %v297, %v295
      %v348 = vpack.c.b16 %v298, %v296
      %v349 = vpack.c.b16 %v301, %v299
      %v350 = vpack.c.b16 %v302, %v300
      %v351 = vpack.c.b16 %v305, %v303
      %v352 = vpack.c.b16 %v306, %v304
      %v353 = vpack.c.b16 %v309, %v307
      %v354 = vpack.c.b16 %v310, %v308
      %v355 = vpack.c.b16 %v313, %v311
      %v356 = vpack.c.b16 %v314, %v312
      %v357 = vpack.c.b16 %v317, %v315
      %v358 = vpack.c.b16 %v318, %v316
      %v359 = vpack.c.b16 %v321, %v319
      %v360 = vpack.c.b16 %v322, %v320
      %v361 = vpack.c.b16 %v325, %v323
      %v362 = vpack.c.b16 %v326, %v324
      %v363 = vpack.c.b16 %v329, %v327
      %v364 = vpack.c.b16 %v330, %v328
      %v365 = vpack.c.b16 %v333, %v331
      %v366 = vpack.c.b16 %v334, %v332
      %399 = vmatpush.bf16.msra.mxu0 %v349
      %400 = vmatpush.bf16.msra.mxu0 %v347
      %401 = vmatpush.bf16.msra.mxu0 %v345
      %402 = vmatpush.bf16.msra.mxu0 %v343
      %403 = vmatpush.bf16.msra.mxu0 %v341
      %404 = vmatpush.bf16.msra.mxu0 %v339
      %405 = vmatpush.bf16.msra.mxu0 %v337
      %406 = vmatpush.bf16.msra.mxu0 %v335
      %407 = vmatmul.bf16.gmra.mxu0 %v231
      %v408 = vpop.f32.mrf.mxu0
      %v409 = vadd.f32 0.0, %v408
      %v410 = vpop.f32.mrf.mxu0
      %v411 = vadd.f32 0.0, %v410
      %412 = vmatmul.bf16.gmra.mxu0 %v233
      %v413 = vpop.f32.mrf.mxu0
      %v414 = vadd.f32 0.0, %v413
      %v415 = vpop.f32.mrf.mxu0
      %v416 = vadd.f32 0.0, %v415
      %417 = vdwg.mxu0
      %418 = vmatpush.bf16.msra.mxu0 %v365
      %419 = vmatpush.bf16.msra.mxu0 %v363
      %420 = vmatpush.bf16.msra.mxu0 %v361
      %421 = vmatpush.bf16.msra.mxu0 %v359
      %422 = vmatpush.bf16.msra.mxu0 %v357
      %423 = vmatpush.bf16.msra.mxu0 %v355
      %424 = vmatpush.bf16.msra.mxu0 %v353
      %425 = vmatpush.bf16.msra.mxu0 %v351
      %426 = vmatmul.bf16.gmra.mxu0 %v232
      %v427 = vpop.f32.mrf.mxu0
      %v428 = vadd.f32 %v409, %v427
      %v429 = vpop.f32.mrf.mxu0
      %v430 = vadd.f32 %v411, %v429
      %431 = vmatmul.bf16.gmra.mxu0 %v234
      %v432 = vpop.f32.mrf.mxu0
      %v433 = vadd.f32 %v414, %v432
      %v434 = vpop.f32.mrf.mxu0
      %v435 = vadd.f32 %v416, %v434
      %436 = vdwg.mxu0
      %437 = vmatpush.bf16.msra.mxu0 %v350
      %438 = vmatpush.bf16.msra.mxu0 %v348
      %439 = vmatpush.bf16.msra.mxu0 %v346
      %440 = vmatpush.bf16.msra.mxu0 %v344
      %441 = vmatpush.bf16.msra.mxu0 %v342
      %442 = vmatpush.bf16.msra.mxu0 %v340
      %443 = vmatpush.bf16.msra.mxu0 %v338
      %444 = vmatpush.bf16.msra.mxu0 %v336
      %445 = vmatmul.bf16.gmra.mxu0 %v231
      %v446 = vpop.f32.mrf.mxu0
      %v447 = vadd.f32 0.0, %v446
      %v448 = vpop.f32.mrf.mxu0
      %v449 = vadd.f32 0.0, %v448
      %450 = vmatmul.bf16.gmra.mxu0 %v233
      %v451 = vpop.f32.mrf.mxu0
      %v452 = vadd.f32 0.0, %v451
      %v453 = vpop.f32.mrf.mxu0
      %v454 = vadd.f32 0.0, %v453
      %455 = vdwg.mxu0
      %456 = vmatpush.bf16.msra.mxu0 %v366
      %457 = vmatpush.bf16.msra.mxu0 %v364
      %458 = vmatpush.bf16.msra.mxu0 %v362
      %459 = vmatpush.bf16.msra.mxu0 %v360
      %460 = vmatpush.bf16.msra.mxu0 %v358
      %461 = vmatpush.bf16.msra.mxu0 %v356
      %462 = vmatpush.bf16.msra.mxu0 %v354
      %463 = vmatpush.bf16.msra.mxu0 %v352
      %464 = vmatmul.bf16.gmra.mxu0 %v232
      %v465 = vpop.f32.mrf.mxu0
      %v466 = vadd.f32 %v447, %v465
      %v467 = vpop.f32.mrf.mxu0
      %v468 = vadd.f32 %v449, %v467
      %469 = vmatmul.bf16.gmra.mxu0 %v234
      %v470 = vpop.f32.mrf.mxu0
      %v471 = vadd.f32 %v452, %v470
      %v472 = vpop.f32.mrf.mxu0
      %v473 = vadd.f32 %v454, %v472
      %474 = vdwg.mxu0
      %475 = vst [vmem:[%s175] sm:$0xff] %v428
      %476 = vst [vmem:[%s175 + $0x8] sm:$0xff] %v466
      %477 = vst [vmem:[%s175 + $0x10] sm:$0xff] %v430
      %478 = vst [vmem:[%s175 + $0x18] sm:$0xff] %v468
      %479 = vst [vmem:[%s175 + $0x20] sm:$0xff] %v433
      %480 = vst [vmem:[%s175 + $0x28] sm:$0xff] %v471
      %481 = vst [vmem:[%s175 + $0x30] sm:$0xff] %v435
      %482 = vst [vmem:[%s175 + $0x38] sm:$0xff] %v473
      %v483 = vld [vmem:[%s3] ss:$8 sm:$0x3]
      %v484 = vadd.f32 %v428, %v430
      %v485 = vadd.f32 %v484, %v433
      %v486 = vadd.f32 %v485, %v435
      %v487 = vrot.slane %v486, 4
      %v488 = vadd.f32 %v486, %v487
      %v489 = vrot.slane %v488, 2
      %v490 = vadd.f32 %v488, %v489
      %v491 = vrot.slane %v490, 1
      %v492 = vadd.f32 %v490, %v491
      %v493 = vadd.f32 %v466, %v468
      %v494 = vadd.f32 %v493, %v471
      %v495 = vadd.f32 %v494, %v473
      %v496 = vrot.slane %v495, 4
      %v497 = vadd.f32 %v495, %v496
      %v498 = vrot.slane %v497, 2
      %v499 = vadd.f32 %v497, %v498
      %v500 = vrot.slane %v499, 1
      %v501 = vadd.f32 %v499, %v500
      %v504 = vrot.slane %v501, 7
      %vm505 = vcmask 1040384
      %v506 = vsel %vm505, %v492, %v504
      %v508 = vadd.f32 %v483, %v506
      %v509 = vlaneseq
      %vm510 = vcmp.ge.s32.totalorder %v509, 0
      %vm511 = vcmp.lt.s32.totalorder %v509, 256
      %vm512 = vmand %vm510, %vm511
      %513 = vst.msk [vmem:[%s3] ss:$8 sm:$0x3] %vm512, %v508
      %514 = vst.msk [vmem:[%s3] ss:$8 sm:$0x0] %vm512, %v508
      %s515 = scalar_lea.vmem %s3, 1
      %v516 = vld [vmem:[%s515] ss:$8 sm:$0x3]
      %v517 = vmul.f32 %v428, %v428
      %v518 = vmul.f32 %v466, %v466
      %v519 = vmul.f32 %v430, %v430
      %v520 = vmul.f32 %v468, %v468
      %v521 = vmul.f32 %v433, %v433
      %v522 = vmul.f32 %v471, %v471
      %v523 = vmul.f32 %v435, %v435
      %v524 = vmul.f32 %v473, %v473
      %v525 = vadd.f32 %v517, %v519
      %v526 = vadd.f32 %v525, %v521
      %v527 = vadd.f32 %v526, %v523
      %v528 = vrot.slane %v527, 4
      %v529 = vadd.f32 %v527, %v528
      %v530 = vrot.slane %v529, 2
      %v531 = vadd.f32 %v529, %v530
      %v532 = vrot.slane %v531, 1
      %v533 = vadd.f32 %v531, %v532
      %v534 = vadd.f32 %v518, %v520
      %v535 = vadd.f32 %v534, %v522
      %v536 = vadd.f32 %v535, %v524
      %v537 = vrot.slane %v536, 4
      %v538 = vadd.f32 %v536, %v537
      %v539 = vrot.slane %v538, 2
      %v540 = vadd.f32 %v538, %v539
      %v541 = vrot.slane %v540, 1
      %v542 = vadd.f32 %v540, %v541
      %v545 = vrot.slane %v542, 7
      %v546 = vsel %vm505, %v533, %v545
      %v548 = vadd.f32 %v516, %v546
      %549 = vst.msk [vmem:[%s515] ss:$8 sm:$0x3] %vm512, %v548
      %550 = vst.msk [vmem:[%s515] ss:$8 sm:$0x0] %vm512, %v548
      %s551 = smul.u32 4, %s15
      %p552 = scmp.lt.s32.totalorder %s551, 7
      %s553 = scalar_select %p552, %s551, 7
      %s554 = smul.addr %s553, 2
      %s555 = smul.addr %s554, 8
      %s556 = scalar_lea.vmem %s2, %s555
      // Predicated region
      $region33: #{projector_forward.3} parent=27 // pred_check
        %p557 = pneg %p80
      $region34: #{projector_forward.3} parent=27 // pred_check_branch
        %559 = sbr.rel (%p557) target = $region36
      $region35: #{projector_forward.3} parent=27 // pred_region
        %s560 = smul.u32 4, %s15
      $region36: #{projector_forward.3} parent=27 // pred_fallthru
        _
      // Predicated region
      $region37: #{projector_forward.3} parent=27 // pred_check
        %p561 = pneg %p101
      $region38: #{projector_forward.3} parent=27 // pred_check_branch
        %563 = sbr.rel (%p561) target = $region40
      $region39: #{projector_forward.3} parent=27 // pred_region
        _
      $region40: #{projector_forward.3} parent=27 // pred_fallthru
        _
      // Predicated region
      $region41: #{projector_forward.3} parent=27 // pred_check
        %p564 = pneg %p101
      $region42: #{projector_forward.3} parent=27 // pred_check_branch
        %566 = sbr.rel (%p564) target = $region44
      $region43: #{projector_forward.3} parent=27 // pred_region
        _
      $region44: #{projector_forward.3} parent=27 // pred_fallthru
        _
    $region28: #{projector_forward.3} parent=5 // pred_fallthru
      _
    %p567 = scmp.le.s32.totalorder 2, %s10
    // Predicated region
    $region45: #{projector_forward.3} parent=5 // pred_check
      %p568 = pneg %p567
    $region46: #{projector_forward.3} parent=5 // pred_check_branch
      %570 = sbr.rel (%p568) target = $region48
    $region47: #{projector_forward.3} parent=5 // pred_region
      %s571 = ssub.s32 %s10, 2
      // Predicated region
      $region49: #{projector_forward.3} parent=47 // pred_check
        %p572 = pneg %p86
      $region50: #{projector_forward.3} parent=47 // pred_check_branch
        %574 = sbr.rel (%p572) target = $region52
      $region51: #{projector_forward.3} parent=47 // pred_region
        %s575 = smul.u32 4, %s16
        %p576 = scmp.lt.s32.totalorder %s575, 7
        %s577 = scalar_select %p576, %s575, 7
        %s578 = smul.addr %s577, 2
        %s579 = smul.addr %s578, 8
        %s580 = scalar_lea.vmem %s2, %s579
      $region52: #{projector_forward.3} parent=47 // pred_fallthru
        _
    $region48: #{projector_forward.3} parent=5 // pred_fallthru
      _
  $region6: #{projector_forward.3} parent=0 // loop_footer
    %s14 = sadd.s32 1, %s10
  $region7: #{projector_forward.3} parent=0 // loop_footer_branch
    %9 = sbr.rel target = $region3
  $region8: #{projector_forward.3} parent=0 // loop_exit
    _

</llo_original>
